<compile_context>
chip_gen: v7x
topology: tpu7x:2x2x1
jax: 0.10.0
libtpu: 0.0.40
codegen_flags: <defaults>
</compile_context>

<pallas_src>
import math
import functools

import jax
import jax.numpy as jnp
from jax.experimental import pallas as pl
from jax.experimental.pallas import tpu as pltpu


def _fused_causal_attn_kernel(x_ref, wq_ref, bq_ref, wkv_ref, bkv_ref, wproj_ref, bproj_ref,
                              o_ref, q_s, k_s, v_s, m_s, l_s, acc_s, *, n_head, scale):
    # x_ref:     (tq, C)   bf16  activations for this query tile (batch dim squeezed)
    # wq_ref:    (C, C)    bf16  c_attn query columns (in x out)
    # bq_ref:    (1, C)    f32
    # wkv_ref:   (C, 2C)   bf16  c_attn key/value columns
    # bkv_ref:   (1, 2C)   f32
    # wproj_ref: (C, C)    bf16  c_proj weight (in x out)
    # bproj_ref: (1, C)    f32
    # o_ref:     (tq, C)   f32   output tile (lane-dense for real configs: C multiple of 128)
    # scratch:   q_s (H,tq,hd) bf16 ; k_s/v_s (n_kv,H,tk,hd) bf16 persistent KV cache
    #            m_s/l_s (H,tq,1) f32 ; acc_s (H,tq,hd) f32
    qi = pl.program_id(1)
    ki = pl.program_id(2)
    n_kv = pl.num_programs(2)

    tq, C = x_ref.shape
    tk = tq
    hd = C // n_head
    NEG = -1e30  # large finite negative: avoids exp(-inf - -inf) NaNs on masked rows/tiles

    @pl.when(ki == 0)
    def _init():
        m_s[...] = jnp.full_like(m_s, NEG)
        l_s[...] = jnp.zeros_like(l_s)
        acc_s[...] = jnp.zeros_like(acc_s)
        # Q projection once per query tile; fold 1/sqrt(hd) into q (T*hd muls, not T*T).
        q = jnp.dot(x_ref[...], wq_ref[...], preferred_element_type=jnp.float32)
        q = (q + bq_ref[...]) * scale
        q_s[...] = jnp.transpose(q.reshape(tq, n_head, hd), (1, 0, 2)).astype(q_s.dtype)

    # K/V projection for sequence tile `ki` is computed exactly once, at the diagonal step
    # (the first grid step that needs it), and cached in VMEM for all later query tiles.
    @pl.when(ki == qi)
    def _project_kv():
        kv = jnp.dot(x_ref[...], wkv_ref[...], preferred_element_type=jnp.float32)
        kv = kv + bkv_ref[...]                                            # (tk, 2C) f32
        k_s[ki] = jnp.transpose(kv[:, :C].reshape(tk, n_head, hd), (1, 0, 2)).astype(k_s.dtype)
        v_s[ki] = jnp.transpose(kv[:, C:].reshape(tk, n_head, hd), (1, 0, 2)).astype(v_s.dtype)

    # Causal skip: with tq == tk, any KV tile with ki > qi is fully masked -> no work.
    @pl.when(ki <= qi)
    def _compute():
        k = k_s[ki]                                                       # (H, tk, hd) bf16
        v = v_s[ki]
        # Batched-over-heads scores on the MXU, f32 accumulation: (H, tq, tk)
        s = jnp.einsum('hqd,hkd->hqk', q_s[...], k,
                       preferred_element_type=jnp.float32)

        # Causal mask with global row/col offsets (all-true for strictly-below-diagonal tiles).
        rows = qi * tq + jax.lax.broadcasted_iota(jnp.int32, (tq, tk), 0)
        cols = ki * tk + jax.lax.broadcasted_iota(jnp.int32, (tq, tk), 1)
        s = jnp.where((rows >= cols)[None, :, :], s, NEG)

        # Online (flash) softmax update, f32 statistics.
        m_prev = m_s[...]
        m_new = jnp.maximum(m_prev, s.max(axis=-1, keepdims=True))
        alpha = jnp.exp(m_prev - m_new)
        p = jnp.exp(s - m_new)
        l_s[...] = alpha * l_s[...] + p.sum(axis=-1, keepdims=True)
        acc_s[...] = alpha * acc_s[...] + jnp.einsum(
            'hqk,hkd->hqd', p.astype(jnp.bfloat16), v,
            preferred_element_type=jnp.float32)
        m_s[...] = m_new

    @pl.when(ki == n_kv - 1)
    def _finalize():
        inv = pl.reciprocal(l_s[...], approx=True)                        # EUP slot, not VALU divide
        y = jnp.transpose(acc_s[...] * inv, (1, 0, 2)).reshape(tq, C)     # merge heads, no concat
        out = jnp.dot(y.astype(jnp.bfloat16), wproj_ref[...],
                      preferred_element_type=jnp.float32) + bproj_ref[...]
        o_ref[...] = out.astype(o_ref.dtype)                              # full-width (tq, C) store


def causal_self_attention(x, w_attn, b_attn, w_proj, b_proj, n_head, *, block_q=128):
    """x: (B, T, C) f32.  w_attn: (3C, C) and w_proj: (C, C) in PyTorch (out, in) layout."""
    B, T, C = x.shape
    assert C % n_head == 0
    hd = C // n_head
    tq = min(block_q, T)
    assert T % tq == 0, "T must be divisible by the q/kv tile size"
    tk = tq
    n_q, n_kv = T // tq, T // tk

    # (in, out) layout; bf16 matmul operands (f32 accumulation inside the kernel).
    w_attn_t = w_attn.T.astype(jnp.bfloat16)                    # (C, 3C)
    w_q = w_attn_t[:, :C]                                       # (C, C)
    w_kv = w_attn_t[:, C:]                                      # (C, 2C)
    b_q = b_attn[:C].reshape(1, C).astype(jnp.float32)
    b_kv = b_attn[C:].reshape(1, 2 * C).astype(jnp.float32)
    w_proj_t = w_proj.T.astype(jnp.bfloat16)                    # (C, C)
    b_proj2 = b_proj.reshape(1, C).astype(jnp.float32)
    x_bf16 = x.astype(jnp.bfloat16)

    kernel = functools.partial(_fused_causal_attn_kernel, n_head=n_head,
                               scale=1.0 / math.sqrt(hd))

    flops = int(2 * B * T * C * 3 * C            # qkv projection (each done exactly once)
                + 2 * B * T * C * C              # output projection
                + 2 * B * n_head * T * T * hd)   # qk^T and p@v (causal ~halves the full 2x term)
    cost = pl.CostEstimate(
        flops=flops,
        transcendentals=int(B * n_head * T * T // 2),
        bytes_accessed=int(x_bf16.size * 2 + x.size * 4
                           + w_attn_t.size * 2 + w_proj_t.size * 2
                           + (b_attn.size + b_proj.size) * 4))

    grid_spec = pltpu.PrefetchScalarGridSpec(
        num_scalar_prefetch=0,
        grid=(B, n_q, n_kv),
        in_specs=[
            # x block index is constant over the KV axis -> Pallas skips re-DMA across ki.
            pl.BlockSpec((pl.Squeezed(), tq, C), lambda b, qi, ki: (b, qi, 0)),
            # Constant-index weight/bias blocks (stay resident across the grid).
            # TODO(synk): on v7x (64 MiB VMEM) single-buffer these via pipeline_mode=pl.Buffered(1).
            pl.BlockSpec((C, C), lambda b, qi, ki: (0, 0)),
            pl.BlockSpec((1, C), lambda b, qi, ki: (0, 0)),
            pl.BlockSpec((C, 2 * C), lambda b, qi, ki: (0, 0)),
            pl.BlockSpec((1, 2 * C), lambda b, qi, ki: (0, 0)),
            pl.BlockSpec((C, C), lambda b, qi, ki: (0, 0)),
            pl.BlockSpec((1, C), lambda b, qi, ki: (0, 0)),
        ],
        out_specs=pl.BlockSpec((pl.Squeezed(), tq, C), lambda b, qi, ki: (b, qi, 0)),
        scratch_shapes=[
            pltpu.VMEM((n_head, tq, hd), jnp.bfloat16),           # scaled q (persists over kv axis)
            pltpu.VMEM((n_kv, n_head, tk, hd), jnp.bfloat16),     # projected K cache (whole sequence)
            pltpu.VMEM((n_kv, n_head, tk, hd), jnp.bfloat16),     # projected V cache (whole sequence)
            pltpu.VMEM((n_head, tq, 1), jnp.float32),             # running max
            pltpu.VMEM((n_head, tq, 1), jnp.float32),             # running denominator
            pltpu.VMEM((n_head, tq, hd), jnp.float32),            # output accumulator
        ],
    )

    return pl.pallas_call(
        kernel,
        out_shape=jax.ShapeDtypeStruct((B, T, C), x.dtype),
        grid_spec=grid_spec,
        compiler_params=pltpu.CompilerParams(
            # q axis must stay sequential per core (the KV cache for tile ki is produced at the
            # diagonal step qi == ki); megacore parallelism comes from the batch axis.
            dimension_semantics=("parallel", "arbitrary", "arbitrary"),
            vmem_limit_bytes=64 * 1024 * 1024),
        cost_estimate=cost,
    )(x_bf16, w_q, b_q, w_kv, b_kv, w_proj_t, b_proj2)


def reference(x, w_attn, b_attn, w_proj, b_proj, n_head):
    B, T, C = x.shape
    hd = C // n_head
    qkv = jnp.einsum("btc,oc->bto", x, w_attn) + b_attn
    q, k, v = qkv[..., :C], qkv[..., C:2 * C], qkv[..., 2 * C:]
    q = q.reshape(B, T, n_head, hd).transpose(0, 2, 1, 3)
    k = k.reshape(B, T, n_head, hd).transpose(0, 2, 1, 3)
    v = v.reshape(B, T, n_head, hd).transpose(0, 2, 1, 3)
    att = jnp.einsum("bhqd,bhkd->bhqk", q, k) / math.sqrt(hd)
    mask = jnp.tril(jnp.ones((T, T), dtype=bool))
    att = jnp.where(mask[None, None], att, -jnp.inf)
    att = jax.nn.softmax(att, axis=-1)
    y = jnp.einsum("bhqk,bhkd->bhqd", att, v)
    y = y.transpose(0, 2, 1, 3).reshape(B, T, C)
    return jnp.einsum("btc,oc->bto", y, w_proj) + b_proj


def _make_inputs(key, B, T, C):
    kx, k1, k2, k3, k4 = jax.random.split(key, 5)
    x = jax.random.normal(kx, (B, T, C), dtype=jnp.float32)
    w_attn = 0.02 * jax.random.normal(k1, (3 * C, C), dtype=jnp.float32)
    b_attn = 0.02 * jax.random.normal(k2, (3 * C,), dtype=jnp.float32)
    w_proj = 0.02 * jax.random.normal(k3, (C, C), dtype=jnp.float32)
    b_proj = 0.02 * jax.random.normal(k4, (C,), dtype=jnp.float32)
    return x, w_attn, b_attn, w_proj, b_proj


if __name__ == "__main__":
    key = jax.random.PRNGKey(0)

    # Small config consistent with the module: B=2, block_size T=8, n_embd C=32, n_head=4.
    B, T, C, n_head = 2, 8, 32, 4
    x, w_attn, b_attn, w_proj, b_proj = _make_inputs(key, B, T, C)
    out = causal_self_attention(x, w_attn, b_attn, w_proj, b_proj, n_head)
    out = jax.block_until_ready(out)
    ref = reference(x, w_attn, b_attn, w_proj, b_proj, n_head)
    assert out.shape == (B, T, C)
    err = float(jnp.max(jnp.abs(out - ref)))
    assert err < 5e-3, f"mismatch vs reference (single-tile): max abs err {err}"

    # Second check exercising the multi-tile causal path, KV caching, and online softmax
    # (4 q x 4 kv tiles, diagonal-first projection + cache reuse across query tiles).
    B2, T2 = 2, 64
    x2, w_attn2, b_attn2, w_proj2, b_proj2 = _make_inputs(jax.random.PRNGKey(0), B2, T2, C)
    out2 = causal_self_attention(x2, w_attn2, b_attn2, w_proj2, b_proj2, n_head, block_q=16)
    out2 = jax.block_until_ready(out2)
    ref2 = reference(x2, w_attn2, b_attn2, w_proj2, b_proj2, n_head)
    err2 = float(jnp.max(jnp.abs(out2 - ref2)))
    assert err2 < 5e-3, f"mismatch vs reference (multi-tile): max abs err {err2}"

    print("KERNEL_OK")
</pallas_src>

<mosaic_0001>
module attributes {stable_mosaic.version = 11 : i64} {
  func.func @_fused_causal_attn_kernel(%arg0: i32, %arg1: i32, %arg2: i32, %arg3: memref<1x8x32xbf16, #tpu.memory_space<vmem>>, %arg4: memref<32x32xbf16, #tpu.memory_space<vmem>>, %arg5: memref<1x32xf32, #tpu.memory_space<vmem>>, %arg6: memref<32x64xbf16, #tpu.memory_space<vmem>>, %arg7: memref<1x64xf32, #tpu.memory_space<vmem>>, %arg8: memref<32x32xbf16, #tpu.memory_space<vmem>>, %arg9: memref<1x32xf32, #tpu.memory_space<vmem>>, %arg10: memref<1x8x32xf32, #tpu.memory_space<vmem>>, %arg11: memref<4x8x8xbf16, #tpu.memory_space<vmem>>, %arg12: memref<1x4x8x8xbf16, #tpu.memory_space<vmem>>, %arg13: memref<1x4x8x8xbf16, #tpu.memory_space<vmem>>, %arg14: memref<4x8x1xf32, #tpu.memory_space<vmem>>, %arg15: memref<4x8x1xf32, #tpu.memory_space<vmem>>, %arg16: memref<4x8x8xf32, #tpu.memory_space<vmem>>) attributes {dimension_semantics = [#tpu.dimension_semantics<parallel>, #tpu.dimension_semantics<arbitrary>, #tpu.dimension_semantics<arbitrary>], iteration_bounds = array<i64: 2, 1, 1>, scalar_prefetch = 0 : i64, scratch_operands = 6 : i64, tpu.core_type = #tpu.core_type<tc>, window_params = [{transform_indices = @transform_0, window_bounds = array<i64: 1, 8, 32>}, {pipeline_mode = #tpu.pipeline_mode<synchronous>, transform_indices = @transform_1, window_bounds = array<i64: 32, 32>}, {pipeline_mode = #tpu.pipeline_mode<synchronous>, transform_indices = @transform_2, window_bounds = array<i64: 1, 32>}, {pipeline_mode = #tpu.pipeline_mode<synchronous>, transform_indices = @transform_3, window_bounds = array<i64: 32, 64>}, {pipeline_mode = #tpu.pipeline_mode<synchronous>, transform_indices = @transform_4, window_bounds = array<i64: 1, 64>}, {pipeline_mode = #tpu.pipeline_mode<synchronous>, transform_indices = @transform_5, window_bounds = array<i64: 32, 32>}, {pipeline_mode = #tpu.pipeline_mode<synchronous>, transform_indices = @transform_6, window_bounds = array<i64: 1, 32>}, {transform_indices = @transform_7, window_bounds = array<i64: 1, 8, 32>}]} {
    %c0_i32 = arith.constant 0 : i32
    %0 = arith.cmpi eq, %arg2, %c0_i32 : i32
    %1 = arith.extui %0 : i1 to i32
    %c0_i32_0 = arith.constant 0 : i32
    %2 = arith.cmpi ne, %1, %c0_i32_0 : i32
    scf.if %2 {
      %cst = arith.constant -1.000000e+30 : f32
      %12 = vector.broadcast %cst : f32 to vector<4x8x1xf32>
      %c0 = arith.constant 0 : index
      %c0_5 = arith.constant 0 : index
      %c0_6 = arith.constant 0 : index
      %13 = vector.load %arg14[%c0, %c0_5, %c0_6] : memref<4x8x1xf32, #tpu.memory_space<vmem>>, vector<4x8x1xf32>
      tpu.vector_store %arg14[%c0, %c0_5, %c0_6], %12 {strides = array<i32>} : memref<4x8x1xf32, #tpu.memory_space<vmem>>, vector<4x8x1xf32>,
      %cst_7 = arith.constant 0.000000e+00 : f32
      %14 = vector.broadcast %cst_7 : f32 to vector<4x8x1xf32>
      %c0_8 = arith.constant 0 : index
      %c0_9 = arith.constant 0 : index
      %c0_10 = arith.constant 0 : index
      %15 = vector.load %arg15[%c0_8, %c0_9, %c0_10] : memref<4x8x1xf32, #tpu.memory_space<vmem>>, vector<4x8x1xf32>
      tpu.vector_store %arg15[%c0_8, %c0_9, %c0_10], %14 {strides = array<i32>} : memref<4x8x1xf32, #tpu.memory_space<vmem>>, vector<4x8x1xf32>,
      %cst_11 = arith.constant 0.000000e+00 : f32
      %16 = vector.broadcast %cst_11 : f32 to vector<4x8x8xf32>
      %c0_12 = arith.constant 0 : index
      %c0_13 = arith.constant 0 : index
      %c0_14 = arith.constant 0 : index
      %17 = vector.load %arg16[%c0_12, %c0_13, %c0_14] : memref<4x8x8xf32, #tpu.memory_space<vmem>>, vector<4x8x8xf32>
      tpu.vector_store %arg16[%c0_12, %c0_13, %c0_14], %16 {strides = array<i32>} : memref<4x8x8xf32, #tpu.memory_space<vmem>>, vector<4x8x8xf32>,
      %c0_15 = arith.constant 0 : index
      %c0_16 = arith.constant 0 : index
      %c0_17 = arith.constant 0 : index
      %18 = vector.load %arg3[%c0_15, %c0_16, %c0_17] : memref<1x8x32xbf16, #tpu.memory_space<vmem>>, vector<1x8x32xbf16>
      %19 = vector.shape_cast %18 : vector<1x8x32xbf16> to vector<8x32xbf16>
      %c0_18 = arith.constant 0 : index
      %c0_19 = arith.constant 0 : index
      %20 = vector.load %arg4[%c0_18, %c0_19] : memref<32x32xbf16, #tpu.memory_space<vmem>>, vector<32x32xbf16>
      %cst_20 = arith.constant dense<0.000000e+00> : vector<8x32xf32>
      %21 = tpu.matmul %19, %20, %cst_20 {dimension_numbers = #tpu.dot_dimension_numbers<[1], [0], [0], [1], [0, 0, 1, 1], [], []>} : vector<8x32xbf16>, vector<32x32xbf16>, vector<8x32xf32> -> vector<8x32xf32>
      %c0_21 = arith.constant 0 : index
      %c0_22 = arith.constant 0 : index
      %22 = vector.load %arg5[%c0_21, %c0_22] : memref<1x32xf32, #tpu.memory_space<vmem>>, vector<1x32xf32>
      %23 = vector.broadcast %22 : vector<1x32xf32> to vector<8x32xf32>
      %24 = arith.addf %21, %23 : vector<8x32xf32>
      %cst_23 = arith.constant 0.353553385 : f32
      %25 = vector.broadcast %cst_23 : f32 to vector<8x32xf32>
      %26 = arith.mulf %24, %25 : vector<8x32xf32>
      %27 = vector.shape_cast %26 : vector<8x32xf32> to vector<8x4x8xf32>
      %28 = tpu.transpose %27, [1, 0, 2] : vector<8x4x8xf32> -> vector<4x8x8xf32>
      %29 = arith.truncf %28 : vector<4x8x8xf32> to vector<4x8x8xbf16>
      %c0_24 = arith.constant 0 : index
      %c0_25 = arith.constant 0 : index
      %c0_26 = arith.constant 0 : index
      %30 = vector.load %arg11[%c0_24, %c0_25, %c0_26] : memref<4x8x8xbf16, #tpu.memory_space<vmem>>, vector<4x8x8xbf16>
      tpu.vector_store %arg11[%c0_24, %c0_25, %c0_26], %29 {strides = array<i32>} : memref<4x8x8xbf16, #tpu.memory_space<vmem>>, vector<4x8x8xbf16>,
    } else {
    }
    %3 = arith.cmpi eq, %arg2, %arg1 : i32
    %4 = arith.extui %3 : i1 to i32
    %c0_i32_1 = arith.constant 0 : i32
    %5 = arith.cmpi ne, %4, %c0_i32_1 : i32
    scf.if %5 {
      %c0 = arith.constant 0 : index
      %c0_5 = arith.constant 0 : index
      %c0_6 = arith.constant 0 : index
      %12 = vector.load %arg3[%c0, %c0_5, %c0_6] : memref<1x8x32xbf16, #tpu.memory_space<vmem>>, vector<1x8x32xbf16>
      %13 = vector.shape_cast %12 : vector<1x8x32xbf16> to vector<8x32xbf16>
      %c0_7 = arith.constant 0 : index
      %c0_8 = arith.constant 0 : index
      %14 = vector.load %arg6[%c0_7, %c0_8] : memref<32x64xbf16, #tpu.memory_space<vmem>>, vector<32x64xbf16>
      %cst = arith.constant dense<0.000000e+00> : vector<8x64xf32>
      %15 = tpu.matmul %13, %14, %cst {dimension_numbers = #tpu.dot_dimension_numbers<[1], [0], [0], [1], [0, 0, 1, 1], [], []>} : vector<8x32xbf16>, vector<32x64xbf16>, vector<8x64xf32> -> vector<8x64xf32>
      %c0_9 = arith.constant 0 : index
      %c0_10 = arith.constant 0 : index
      %16 = vector.load %arg7[%c0_9, %c0_10] : memref<1x64xf32, #tpu.memory_space<vmem>>, vector<1x64xf32>
      %17 = vector.broadcast %16 : vector<1x64xf32> to vector<8x64xf32>
      %18 = arith.addf %15, %17 : vector<8x64xf32>
      %19 = vector.extract_strided_slice %18 {offsets = [0, 0], sizes = [8, 32], strides = [1, 1]} : vector<8x64xf32> to vector<8x32xf32>
      %20 = vector.shape_cast %19 : vector<8x32xf32> to vector<8x4x8xf32>
      %21 = tpu.transpose %20, [1, 0, 2] : vector<8x4x8xf32> -> vector<4x8x8xf32>
      %22 = arith.truncf %21 : vector<4x8x8xf32> to vector<4x8x8xbf16>
      %23 = arith.index_cast %arg2 : i32 to index
      %c0_11 = arith.constant 0 : index
      %c0_12 = arith.constant 0 : index
      %c0_13 = arith.constant 0 : index
      %24 = vector.load %arg12[%23, %c0_11, %c0_12, %c0_13] : memref<1x4x8x8xbf16, #tpu.memory_space<vmem>>, vector<1x4x8x8xbf16>
      %25 = vector.shape_cast %24 : vector<1x4x8x8xbf16> to vector<4x8x8xbf16>
      %26 = vector.shape_cast %22 : vector<4x8x8xbf16> to vector<1x4x8x8xbf16>
      tpu.vector_store %arg12[%23, %c0_11, %c0_12, %c0_13], %26 {strides = array<i32>} : memref<1x4x8x8xbf16, #tpu.memory_space<vmem>>, vector<1x4x8x8xbf16>,
      %27 = vector.extract_strided_slice %18 {offsets = [0, 32], sizes = [8, 32], strides = [1, 1]} : vector<8x64xf32> to vector<8x32xf32>
      %28 = vector.shape_cast %27 : vector<8x32xf32> to vector<8x4x8xf32>
      %29 = tpu.transpose %28, [1, 0, 2] : vector<8x4x8xf32> -> vector<4x8x8xf32>
      %30 = arith.truncf %29 : vector<4x8x8xf32> to vector<4x8x8xbf16>
      %31 = arith.index_cast %arg2 : i32 to index
      %c0_14 = arith.constant 0 : index
      %c0_15 = arith.constant 0 : index
      %c0_16 = arith.constant 0 : index
      %32 = vector.load %arg13[%31, %c0_14, %c0_15, %c0_16] : memref<1x4x8x8xbf16, #tpu.memory_space<vmem>>, vector<1x4x8x8xbf16>
      %33 = vector.shape_cast %32 : vector<1x4x8x8xbf16> to vector<4x8x8xbf16>
      %34 = vector.shape_cast %30 : vector<4x8x8xbf16> to vector<1x4x8x8xbf16>
      tpu.vector_store %arg13[%31, %c0_14, %c0_15, %c0_16], %34 {strides = array<i32>} : memref<1x4x8x8xbf16, #tpu.memory_space<vmem>>, vector<1x4x8x8xbf16>,
    } else {
    }
    %6 = arith.cmpi sle, %arg2, %arg1 : i32
    %7 = arith.extui %6 : i1 to i32
    %c0_i32_2 = arith.constant 0 : i32
    %8 = arith.cmpi ne, %7, %c0_i32_2 : i32
    scf.if %8 {
      %12 = arith.index_cast %arg2 : i32 to index
      %c0 = arith.constant 0 : index
      %c0_5 = arith.constant 0 : index
      %c0_6 = arith.constant 0 : index
      %13 = vector.load %arg12[%12, %c0, %c0_5, %c0_6] : memref<1x4x8x8xbf16, #tpu.memory_space<vmem>>, vector<1x4x8x8xbf16>
      %14 = vector.shape_cast %13 : vector<1x4x8x8xbf16> to vector<4x8x8xbf16>
      %15 = arith.index_cast %arg2 : i32 to index
      %c0_7 = arith.constant 0 : index
      %c0_8 = arith.constant 0 : index
      %c0_9 = arith.constant 0 : index
      %16 = vector.load %arg13[%15, %c0_7, %c0_8, %c0_9] : memref<1x4x8x8xbf16, #tpu.memory_space<vmem>>, vector<1x4x8x8xbf16>
      %17 = vector.shape_cast %16 : vector<1x4x8x8xbf16> to vector<4x8x8xbf16>
      %c0_10 = arith.constant 0 : index
      %c0_11 = arith.constant 0 : index
      %c0_12 = arith.constant 0 : index
      %18 = vector.load %arg11[%c0_10, %c0_11, %c0_12] : memref<4x8x8xbf16, #tpu.memory_space<vmem>>, vector<4x8x8xbf16>
      "tpu.trace_start"() <{level = 10 : i32, message = "hqd,hkd->hqk"}> : () -> ()
      %cst = arith.constant dense<0.000000e+00> : vector<4x8x8xf32>
      %19 = tpu.matmul %18, %14, %cst {dimension_numbers = #tpu.dot_dimension_numbers<[2], [2], [1], [1], [0, 0, 0, 1, 1, 1], [0], [0]>} : vector<4x8x8xbf16>, vector<4x8x8xbf16>, vector<4x8x8xf32> -> vector<4x8x8xf32>
      "tpu.trace_stop"() : () -> ()
      %c8_i32 = arith.constant 8 : i32
      %20 = arith.muli %arg1, %c8_i32 : i32
      %21 = tpu.iota {dimensions = array<i32: 0>} : vector<8x8xi32>
      %22 = vector.broadcast %20 : i32 to vector<8x8xi32>
      %23 = arith.addi %22, %21 : vector<8x8xi32>
      %c8_i32_13 = arith.constant 8 : i32
      %24 = arith.muli %arg2, %c8_i32_13 : i32
      %25 = tpu.iota {dimensions = array<i32: 1>} : vector<8x8xi32>
      %26 = vector.broadcast %24 : i32 to vector<8x8xi32>
      %27 = arith.addi %26, %25 : vector<8x8xi32>
      %28 = arith.cmpi sge, %23, %27 : vector<8x8xi32>
      %29 = vector.shape_cast %28 : vector<8x8xi1> to vector<1x8x8xi1>
      %cst_14 = arith.constant -1.000000e+30 : f32
      %30 = vector.shape_cast %29 : vector<1x8x8xi1> to vector<1x8x8xi1>
      %31 = vector.broadcast %30 : vector<1x8x8xi1> to vector<4x8x8xi1>
      %32 = vector.broadcast %cst_14 : f32 to vector<4x8x8xf32>
      %33 = arith.select %31, %19, %32 : vector<4x8x8xi1>, vector<4x8x8xf32>
      %c0_15 = arith.constant 0 : index
      %c0_16 = arith.constant 0 : index
      %c0_17 = arith.constant 0 : index
      %34 = vector.load %arg14[%c0_15, %c0_16, %c0_17] : memref<4x8x1xf32, #tpu.memory_space<vmem>>, vector<4x8x1xf32>
      %cst_18 = arith.constant dense<0xFF800000> : vector<4x8xf32>
      %35 = vector.multi_reduction <maximumf>, %33, %cst_18 [2] : vector<4x8x8xf32> to vector<4x8xf32>
      %36 = vector.shape_cast %35 : vector<4x8xf32> to vector<4x8x1xf32>
      %37 = arith.maximumf %34, %36 : vector<4x8x1xf32>
      %38 = arith.subf %34, %37 : vector<4x8x1xf32>
      %39 = math.exp %38 : vector<4x8x1xf32>
      %40 = vector.broadcast %37 : vector<4x8x1xf32> to vector<4x8x8xf32>
      %41 = arith.subf %33, %40 : vector<4x8x8xf32>
      %42 = math.exp %41 : vector<4x8x8xf32>
      %c0_19 = arith.constant 0 : index
      %c0_20 = arith.constant 0 : index
      %c0_21 = arith.constant 0 : index
      %43 = vector.load %arg15[%c0_19, %c0_20, %c0_21] : memref<4x8x1xf32, #tpu.memory_space<vmem>>, vector<4x8x1xf32>
      %44 = arith.mulf %39, %43 : vector<4x8x1xf32>
      %cst_22 = arith.constant dense<0.000000e+00> : vector<4x8xf32>
      %45 = vector.multi_reduction <add>, %42, %cst_22 [2] : vector<4x8x8xf32> to vector<4x8xf32>
      %46 = vector.shape_cast %45 : vector<4x8xf32> to vector<4x8x1xf32>
      %47 = arith.addf %44, %46 : vector<4x8x1xf32>
      %c0_23 = arith.constant 0 : index
      %c0_24 = arith.constant 0 : index
      %c0_25 = arith.constant 0 : index
      %48 = vector.load %arg15[%c0_23, %c0_24, %c0_25] : memref<4x8x1xf32, #tpu.memory_space<vmem>>, vector<4x8x1xf32>
      tpu.vector_store %arg15[%c0_23, %c0_24, %c0_25], %47 {strides = array<i32>} : memref<4x8x1xf32, #tpu.memory_space<vmem>>, vector<4x8x1xf32>,
      %c0_26 = arith.constant 0 : index
      %c0_27 = arith.constant 0 : index
      %c0_28 = arith.constant 0 : index
      %49 = vector.load %arg16[%c0_26, %c0_27, %c0_28] : memref<4x8x8xf32, #tpu.memory_space<vmem>>, vector<4x8x8xf32>
      %50 = vector.broadcast %39 : vector<4x8x1xf32> to vector<4x8x8xf32>
      %51 = arith.mulf %50, %49 : vector<4x8x8xf32>
      %52 = arith.truncf %42 : vector<4x8x8xf32> to vector<4x8x8xbf16>
      "tpu.trace_start"() <{level = 10 : i32, message = "hqk,hkd->hqd"}> : () -> ()
      %cst_29 = arith.constant dense<0.000000e+00> : vector<4x8x8xf32>
      %53 = tpu.matmul %52, %17, %cst_29 {dimension_numbers = #tpu.dot_dimension_numbers<[2], [1], [1], [2], [0, 0, 0, 1, 1, 2], [0], [0]>} : vector<4x8x8xbf16>, vector<4x8x8xbf16>, vector<4x8x8xf32> -> vector<4x8x8xf32>
      "tpu.trace_stop"() : () -> ()
      %54 = arith.addf %51, %53 : vector<4x8x8xf32>
      %c0_30 = arith.constant 0 : index
      %c0_31 = arith.constant 0 : index
      %c0_32 = arith.constant 0 : index
      %55 = vector.load %arg16[%c0_30, %c0_31, %c0_32] : memref<4x8x8xf32, #tpu.memory_space<vmem>>, vector<4x8x8xf32>
      tpu.vector_store %arg16[%c0_30, %c0_31, %c0_32], %54 {strides = array<i32>} : memref<4x8x8xf32, #tpu.memory_space<vmem>>, vector<4x8x8xf32>,
      %c0_33 = arith.constant 0 : index
      %c0_34 = arith.constant 0 : index
      %c0_35 = arith.constant 0 : index
      %56 = vector.load %arg14[%c0_33, %c0_34, %c0_35] : memref<4x8x1xf32, #tpu.memory_space<vmem>>, vector<4x8x1xf32>
      tpu.vector_store %arg14[%c0_33, %c0_34, %c0_35], %37 {strides = array<i32>} : memref<4x8x1xf32, #tpu.memory_space<vmem>>, vector<4x8x1xf32>,
    } else {
    }
    %c0_i32_3 = arith.constant 0 : i32
    %9 = arith.cmpi eq, %arg2, %c0_i32_3 : i32
    %10 = arith.extui %9 : i1 to i32
    %c0_i32_4 = arith.constant 0 : i32
    %11 = arith.cmpi ne, %10, %c0_i32_4 : i32
    scf.if %11 {
      %c0 = arith.constant 0 : index
      %c0_5 = arith.constant 0 : index
      %c0_6 = arith.constant 0 : index
      %12 = vector.load %arg15[%c0, %c0_5, %c0_6] : memref<4x8x1xf32, #tpu.memory_space<vmem>>, vector<4x8x1xf32>
      %13 = tpu.reciprocal %12 {approx = true} : vector<4x8x1xf32> -> vector<4x8x1xf32>
      %c0_7 = arith.constant 0 : index
      %c0_8 = arith.constant 0 : index
      %c0_9 = arith.constant 0 : index
      %14 = vector.load %arg16[%c0_7, %c0_8, %c0_9] : memref<4x8x8xf32, #tpu.memory_space<vmem>>, vector<4x8x8xf32>
      %15 = vector.broadcast %13 : vector<4x8x1xf32> to vector<4x8x8xf32>
      %16 = arith.mulf %14, %15 : vector<4x8x8xf32>
      %17 = tpu.transpose %16, [1, 0, 2] : vector<4x8x8xf32> -> vector<8x4x8xf32>
      %18 = vector.shape_cast %17 : vector<8x4x8xf32> to vector<8x32xf32>
      %19 = arith.truncf %18 : vector<8x32xf32> to vector<8x32xbf16>
      %c0_10 = arith.constant 0 : index
      %c0_11 = arith.constant 0 : index
      %20 = vector.load %arg8[%c0_10, %c0_11] : memref<32x32xbf16, #tpu.memory_space<vmem>>, vector<32x32xbf16>
      %cst = arith.constant dense<0.000000e+00> : vector<8x32xf32>
      %21 = tpu.matmul %19, %20, %cst {dimension_numbers = #tpu.dot_dimension_numbers<[1], [0], [0], [1], [0, 0, 1, 1], [], []>} : vector<8x32xbf16>, vector<32x32xbf16>, vector<8x32xf32> -> vector<8x32xf32>
      %c0_12 = arith.constant 0 : index
      %c0_13 = arith.constant 0 : index
      %22 = vector.load %arg9[%c0_12, %c0_13] : memref<1x32xf32, #tpu.memory_space<vmem>>, vector<1x32xf32>
      %23 = vector.broadcast %22 : vector<1x32xf32> to vector<8x32xf32>
      %24 = arith.addf %21, %23 : vector<8x32xf32>
      %c0_14 = arith.constant 0 : index
      %c0_15 = arith.constant 0 : index
      %c0_16 = arith.constant 0 : index
      %25 = vector.load %arg10[%c0_14, %c0_15, %c0_16] : memref<1x8x32xf32, #tpu.memory_space<vmem>>, vector<1x8x32xf32>
      %26 = vector.shape_cast %25 : vector<1x8x32xf32> to vector<8x32xf32>
      %27 = vector.shape_cast %24 : vector<8x32xf32> to vector<1x8x32xf32>
      tpu.vector_store %arg10[%c0_14, %c0_15, %c0_16], %27 {strides = array<i32>} : memref<1x8x32xf32, #tpu.memory_space<vmem>>, vector<1x8x32xf32>,
    } else {
    }
    return
  }
  func.func @transform_0(%arg0: i32, %arg1: i32, %arg2: i32) -> (i32, i32, i32) {
    %c0_i32 = arith.constant 0 : i32
    %c0_i32_0 = arith.constant 0 : i32
    return %arg0, %arg1, %c0_i32 : i32, i32, i32
  }
  func.func @transform_1(%arg0: i32, %arg1: i32, %arg2: i32) -> (i32, i32) {
    %c0_i32 = arith.constant 0 : i32
    %c0_i32_0 = arith.constant 0 : i32
    %c0_i32_1 = arith.constant 0 : i32
    return %c0_i32, %c0_i32_0 : i32, i32
  }
  func.func @transform_2(%arg0: i32, %arg1: i32, %arg2: i32) -> (i32, i32) {
    %c0_i32 = arith.constant 0 : i32
    %c0_i32_0 = arith.constant 0 : i32
    %c0_i32_1 = arith.constant 0 : i32
    return %c0_i32, %c0_i32_0 : i32, i32
  }
  func.func @transform_3(%arg0: i32, %arg1: i32, %arg2: i32) -> (i32, i32) {
    %c0_i32 = arith.constant 0 : i32
    %c0_i32_0 = arith.constant 0 : i32
    %c0_i32_1 = arith.constant 0 : i32
    return %c0_i32, %c0_i32_0 : i32, i32
  }
  func.func @transform_4(%arg0: i32, %arg1: i32, %arg2: i32) -> (i32, i32) {
    %c0_i32 = arith.constant 0 : i32
    %c0_i32_0 = arith.constant 0 : i32
    %c0_i32_1 = arith.constant 0 : i32
    return %c0_i32, %c0_i32_0 : i32, i32
  }
  func.func @transform_5(%arg0: i32, %arg1: i32, %arg2: i32) -> (i32, i32) {
    %c0_i32 = arith.constant 0 : i32
    %c0_i32_0 = arith.constant 0 : i32
    %c0_i32_1 = arith.constant 0 : i32
    return %c0_i32, %c0_i32_0 : i32, i32
  }
  func.func @transform_6(%arg0: i32, %arg1: i32, %arg2: i32) -> (i32, i32) {
    %c0_i32 = arith.constant 0 : i32
    %c0_i32_0 = arith.constant 0 : i32
    %c0_i32_1 = arith.constant 0 : i32
    return %c0_i32, %c0_i32_0 : i32, i32
  }
  func.func @transform_7(%arg0: i32, %arg1: i32, %arg2: i32) -> (i32, i32, i32) {
    %c0_i32 = arith.constant 0 : i32
    %c0_i32_0 = arith.constant 0 : i32
    return %arg0, %arg1, %c0_i32 : i32, i32, i32
  }
}

</mosaic_0001>

<llo_original>
// kernel: tpu_custom_call.1
$region0: #{tpu_custom_call.1}
  #allocation0 [shape = 'u32[]', space=smem, size = 0x4, offset = 0x4, fixed_abs, tag = 'smem constant byte address 0x4 - core index']
  #allocation1 [shape = 'u32[144,128]{1,0:T(1,128)}', space=vmem, size = 0x12000, scoped, tag = 'internal scratch']
  #allocation2 [shape = 'bf16[4,8,8]{2,1,0:T(8,128)(2,1)}', space=vmem, size = 0x2000, scoped, tag = 'scratch operand']
  #allocation3 [shape = 'bf16[1,4,8,8]{3,2,1,0:T(8,128)(2,1)}', space=vmem, size = 0x2000, scoped, tag = 'scratch operand']
  #allocation4 [shape = 'bf16[1,4,8,8]{3,2,1,0:T(8,128)(2,1)}', space=vmem, size = 0x2000, scoped, tag = 'scratch operand']
  #allocation5 [shape = 'f32[4,8,1]{2,1,0:T(8,128)}', space=vmem, size = 0x4000, scoped, tag = 'scratch operand']
  #allocation6 [shape = 'f32[4,8,1]{2,1,0:T(8,128)}', space=vmem, size = 0x4000, scoped, tag = 'scratch operand']
  #allocation7 [shape = 'f32[4,8,8]{2,1,0:T(8,128)}', space=vmem, size = 0x4000, scoped, tag = 'scratch operand']
  %s0 = inlined_call_operand.hbm [shape: bf16[2,8,32], index: 0, kind: input, shape index: {}]
  %s1 = inlined_call_operand.hbm [shape: bf16[32,32], index: 1, kind: input, shape index: {}]
  %s2 = inlined_call_operand.hbm [shape: f32[1,32], index: 2, kind: input, shape index: {}]
  %s3 = inlined_call_operand.hbm [shape: bf16[32,64], index: 3, kind: input, shape index: {}]
  %s4 = inlined_call_operand.hbm [shape: f32[1,64], index: 4, kind: input, shape index: {}]
  %s5 = inlined_call_operand.hbm [shape: bf16[32,32], index: 5, kind: input, shape index: {}]
  %s6 = inlined_call_operand.hbm [shape: f32[1,32], index: 6, kind: input, shape index: {}]
  %s7 = inlined_call_operand.hbm [shape: f32[2,8,32], index: 7, kind: output, shape index: {}]
  %s8 = sld [smem:[#allocation0]]
  $region105: #{tpu_custom_call.1} parent=0
    _
  %s10 = ssub.s32 1, %s8
  %s11 = scalar_select 0, %s10, %s8
  $region1: #{tpu_custom_call.1} parent=0
    #allocation8 [shape = 'u8[4096]{0}', space=vmem, size = 0x1000, scoped, tag = 'input window, operand 0']
    #allocation9 [shape = 's32[2]{0}', space=sflag, size = 0x8, scoped, tag = 'scoped memory for tpu_custom_call.1']
    #allocation10 [shape = 's32[2]{0}', space=sflag, size = 0x8, scoped, tag = 'scoped memory for tpu_custom_call.1']
    #allocation11 [shape = 'u8[8192]{0}', space=vmem, size = 0x2000, scoped, tag = 'input window, operand 1, single buffered']
    #allocation12 [shape = 's32[1]{0}', space=sflag, size = 0x4, scoped, tag = 'scoped memory for tpu_custom_call.1']
    #allocation13 [shape = 'u8[512]{0}', space=vmem, size = 0x400, scoped, tag = 'input window, operand 2, single buffered']
    #allocation14 [shape = 'u8[8192]{0}', space=vmem, size = 0x2000, scoped, tag = 'input window, operand 3, single buffered']
    #allocation15 [shape = 's32[1]{0}', space=sflag, size = 0x4, scoped, tag = 'scoped memory for tpu_custom_call.1']
    #allocation16 [shape = 'u8[512]{0}', space=vmem, size = 0x400, scoped, tag = 'input window, operand 4, single buffered']
    #allocation17 [shape = 'u8[8192]{0}', space=vmem, size = 0x2000, scoped, tag = 'input window, operand 5, single buffered']
    #allocation18 [shape = 's32[1]{0}', space=sflag, size = 0x4, scoped, tag = 'scoped memory for tpu_custom_call.1']
    #allocation19 [shape = 'u8[512]{0}', space=vmem, size = 0x400, scoped, tag = 'input window, operand 6, single buffered']
    #allocation20 [shape = 'u8[8192]{0}', space=vmem, size = 0x2000, scoped, tag = 'output window, operand 0']
    %12 = vsyncpa [#allocation9], 0
    %s13 = scalar_lea.sflag [#allocation9], 1
    %14 = vsyncpa %s13, 0
    %15 = vsyncpa [#allocation12], 0
    %16 = vsyncpa [#allocation15], 0
    %17 = vsyncpa [#allocation18], 0
    %18 = vsyncpa [#allocation10], 0
    %s19 = scalar_lea.sflag [#allocation10], 1
    %20 = vsyncpa %s19, 0
    loop: start=0, step=1, limit=4
    $region2: #{tpu_custom_call.1} parent=1 // loop_pre_header
      _
    $region3: #{tpu_custom_call.1} parent=1 // loop_header
      %s22 = sphi 0, %s26
      %p23 = scmp.ge.s32.totalorder %s22, 4
      %s29 = sphi 0, %s48
      %s30 = sphi 0, %s44
      %s31 = sphi 0, %s40
      %s32 = sphi 0, %s29
      %s33 = sphi 0, %s30
      %s34 = sphi 0, %s31
      %s35 = sphi 0, %s32
      %s36 = sphi 0, %s33
      %s37 = sphi 0, %s34
      %s53 = sphi 0, %s55
      %s56 = sphi 0, %s53
      %s57 = sphi 0, %s56
      %s73 = sphi 0, %s57
      %s77 = sphi 0, %s77
      %s79 = sphi 0, %s77
      %s80 = sphi 0, %s79
      %s94 = sphi 0, %s80
      %s98 = sphi 0, %s98
      %s100 = sphi 0, %s98
      %s101 = sphi 0, %s100
      %s115 = sphi 0, %s101
      %s119 = sphi 0, %s119
      %s121 = sphi 0, %s119
      %s122 = sphi 0, %s121
      %s136 = sphi 0, %s122
      %s140 = sphi 0, %s140
      %s142 = sphi 0, %s140
      %s143 = sphi 0, %s142
      %s157 = sphi 0, %s143
      %s161 = sphi 0, %s161
      %s163 = sphi 0, %s161
      %s164 = sphi 0, %s163
      %s178 = sphi 0, %s164
      %s182 = sphi 0, %s182
      %s184 = sphi 0, %s182
      %s185 = sphi 0, %s184
      %s199 = sphi 0, %s185
      %s207 = sphi 0, %s209
      %s210 = sphi 0, %s207
      %s211 = sphi 0, %s210
      %s227 = sphi 0, %s211
    $region4: #{tpu_custom_call.1} parent=1 // loop_header_branch
      %25 = sbr.rel (%p23) target = $region8
    $region5: #{tpu_custom_call.1} parent=1 // loop_body
      %s27 = ssub.s32 %s22, 1
      %s28 = ssub.s32 %s22, 2
      %s38 = sadd.s32 1, %s31
      %p39 = scmp.ge.s32.totalorder %s38, 1
      %s40 = scalar_select %p39, 0, %s38
      %s41 = sadd.s32 1, %s30
      %s42 = scalar_select %p39, %s41, %s30
      %p43 = scmp.ge.s32.totalorder %s42, 1
      %s44 = scalar_select %p43, 0, %s42
      %s45 = sadd.s32 1, %s29
      %s46 = scalar_select %p43, %s45, %s29
      %p47 = scmp.ge.s32.totalorder %s46, 2
      %s48 = scalar_select %p47, 0, %s46
      %s49 = ssub.s32 %s29, %s48
      %s50 = ssub.s32 %s30, %s44
      %s51 = sor.u32 %s49, %s50
      %p52 = scmp.eq.s32.totalorder %s51, 0
      %s54 = sadd.s32 %s53, 1
      %s55 = scalar_select %p52, %s53, %s54
      %p58 = pneg %p52
      %p59 = scmp.eq.s32.totalorder %s22, 1
      %p60 = por %p58, %p59
      %p61 = scmp.ne.s32.totalorder %s53, %s56
      %p62 = scmp.eq.s32.totalorder %s22, 0
      %p63 = por %p61, %p62
      %p64 = scmp.ne.s32.totalorder %s53, %s56
      %p65 = scmp.eq.s32.totalorder %s27, 1
      %p66 = por %p64, %p65
      %p67 = scmp.ne.s32.totalorder %s56, %s57
      %p68 = scmp.eq.s32.totalorder %s27, 0
      %p69 = por %p67, %p68
      %p70 = scmp.ne.s32.totalorder %s56, %s57
      %p71 = scmp.eq.s32.totalorder %s28, 1
      %p72 = por %p70, %p71
      %p74 = scmp.ne.s32.totalorder %s57, %s73
      %p75 = scmp.eq.s32.totalorder %s28, 0
      %p76 = por %p74, %p75
      %s78 = sadd.s32 %s77, 1
      %p81 = scmp.eq.s32.totalorder %s22, 1
      %p82 = scmp.ne.s32.totalorder %s77, %s79
      %p83 = scmp.eq.s32.totalorder %s22, 0
      %p84 = por %p82, %p83
      %p85 = scmp.ne.s32.totalorder %s77, %s79
      %p86 = scmp.eq.s32.totalorder %s27, 1
      %p87 = por %p85, %p86
      %p88 = scmp.ne.s32.totalorder %s79, %s80
      %p89 = scmp.eq.s32.totalorder %s27, 0
      %p90 = por %p88, %p89
      %p91 = scmp.ne.s32.totalorder %s79, %s80
      %p92 = scmp.eq.s32.totalorder %s28, 1
      %p93 = por %p91, %p92
      %p95 = scmp.ne.s32.totalorder %s80, %s94
      %p96 = scmp.eq.s32.totalorder %s28, 0
      %p97 = por %p95, %p96
      %s99 = sadd.s32 %s98, 1
      %p102 = scmp.eq.s32.totalorder %s22, 1
      %p103 = scmp.ne.s32.totalorder %s98, %s100
      %p104 = scmp.eq.s32.totalorder %s22, 0
      %p105 = por %p103, %p104
      %p106 = scmp.ne.s32.totalorder %s98, %s100
      %p107 = scmp.eq.s32.totalorder %s27, 1
      %p108 = por %p106, %p107
      %p109 = scmp.ne.s32.totalorder %s100, %s101
      %p110 = scmp.eq.s32.totalorder %s27, 0
      %p111 = por %p109, %p110
      %p112 = scmp.ne.s32.totalorder %s100, %s101
      %p113 = scmp.eq.s32.totalorder %s28, 1
      %p114 = por %p112, %p113
      %p116 = scmp.ne.s32.totalorder %s101, %s115
      %p117 = scmp.eq.s32.totalorder %s28, 0
      %p118 = por %p116, %p117
      %s120 = sadd.s32 %s119, 1
      %p123 = scmp.eq.s32.totalorder %s22, 1
      %p124 = scmp.ne.s32.totalorder %s119, %s121
      %p125 = scmp.eq.s32.totalorder %s22, 0
      %p126 = por %p124, %p125
      %p127 = scmp.ne.s32.totalorder %s119, %s121
      %p128 = scmp.eq.s32.totalorder %s27, 1
      %p129 = por %p127, %p128
      %p130 = scmp.ne.s32.totalorder %s121, %s122
      %p131 = scmp.eq.s32.totalorder %s27, 0
      %p132 = por %p130, %p131
      %p133 = scmp.ne.s32.totalorder %s121, %s122
      %p134 = scmp.eq.s32.totalorder %s28, 1
      %p135 = por %p133, %p134
      %p137 = scmp.ne.s32.totalorder %s122, %s136
      %p138 = scmp.eq.s32.totalorder %s28, 0
      %p139 = por %p137, %p138
      %s141 = sadd.s32 %s140, 1
      %p144 = scmp.eq.s32.totalorder %s22, 1
      %p145 = scmp.ne.s32.totalorder %s140, %s142
      %p146 = scmp.eq.s32.totalorder %s22, 0
      %p147 = por %p145, %p146
      %p148 = scmp.ne.s32.totalorder %s140, %s142
      %p149 = scmp.eq.s32.totalorder %s27, 1
      %p150 = por %p148, %p149
      %p151 = scmp.ne.s32.totalorder %s142, %s143
      %p152 = scmp.eq.s32.totalorder %s27, 0
      %p153 = por %p151, %p152
      %p154 = scmp.ne.s32.totalorder %s142, %s143
      %p155 = scmp.eq.s32.totalorder %s28, 1
      %p156 = por %p154, %p155
      %p158 = scmp.ne.s32.totalorder %s143, %s157
      %p159 = scmp.eq.s32.totalorder %s28, 0
      %p160 = por %p158, %p159
      %s162 = sadd.s32 %s161, 1
      %p165 = scmp.eq.s32.totalorder %s22, 1
      %p166 = scmp.ne.s32.totalorder %s161, %s163
      %p167 = scmp.eq.s32.totalorder %s22, 0
      %p168 = por %p166, %p167
      %p169 = scmp.ne.s32.totalorder %s161, %s163
      %p170 = scmp.eq.s32.totalorder %s27, 1
      %p171 = por %p169, %p170
      %p172 = scmp.ne.s32.totalorder %s163, %s164
      %p173 = scmp.eq.s32.totalorder %s27, 0
      %p174 = por %p172, %p173
      %p175 = scmp.ne.s32.totalorder %s163, %s164
      %p176 = scmp.eq.s32.totalorder %s28, 1
      %p177 = por %p175, %p176
      %p179 = scmp.ne.s32.totalorder %s164, %s178
      %p180 = scmp.eq.s32.totalorder %s28, 0
      %p181 = por %p179, %p180
      %s183 = sadd.s32 %s182, 1
      %p186 = scmp.eq.s32.totalorder %s22, 1
      %p187 = scmp.ne.s32.totalorder %s182, %s184
      %p188 = scmp.eq.s32.totalorder %s22, 0
      %p189 = por %p187, %p188
      %p190 = scmp.ne.s32.totalorder %s182, %s184
      %p191 = scmp.eq.s32.totalorder %s27, 1
      %p192 = por %p190, %p191
      %p193 = scmp.ne.s32.totalorder %s184, %s185
      %p194 = scmp.eq.s32.totalorder %s27, 0
      %p195 = por %p193, %p194
      %p196 = scmp.ne.s32.totalorder %s184, %s185
      %p197 = scmp.eq.s32.totalorder %s28, 1
      %p198 = por %p196, %p197
      %p200 = scmp.ne.s32.totalorder %s185, %s199
      %p201 = scmp.eq.s32.totalorder %s28, 0
      %p202 = por %p200, %p201
      %s203 = ssub.s32 %s29, %s48
      %s204 = ssub.s32 %s30, %s44
      %s205 = sor.u32 %s203, %s204
      %p206 = scmp.eq.s32.totalorder %s205, 0
      %s208 = sadd.s32 %s207, 1
      %s209 = scalar_select %p206, %s207, %s208
      %p212 = pneg %p206
      %p213 = scmp.eq.s32.totalorder %s22, 1
      %p214 = por %p212, %p213
      %p215 = scmp.ne.s32.totalorder %s207, %s210
      %p216 = scmp.eq.s32.totalorder %s22, 0
      %p217 = por %p215, %p216
      %p218 = scmp.ne.s32.totalorder %s207, %s210
      %p219 = scmp.eq.s32.totalorder %s27, 1
      %p220 = por %p218, %p219
      %p221 = scmp.ne.s32.totalorder %s210, %s211
      %p222 = scmp.eq.s32.totalorder %s27, 0
      %p223 = por %p221, %p222
      %p224 = scmp.ne.s32.totalorder %s210, %s211
      %p225 = scmp.eq.s32.totalorder %s28, 1
      %p226 = por %p224, %p225
      %p228 = scmp.ne.s32.totalorder %s211, %s227
      %p229 = scmp.eq.s32.totalorder %s28, 0
      %p230 = por %p228, %p229
      %p231 = scmp.le.s32.totalorder 1, %s22
      %p232 = scmp.lt.s32.totalorder %s22, 3
      %p233 = pnand %p231, %p232
      %p234 = pneg %p233
      // Predicated region
      $region9: #{tpu_custom_call.1} parent=5 // pred_check
        _
      $region10: #{tpu_custom_call.1} parent=5 // pred_check_branch
        %236 = sbr.rel (%p233) target = $region12
      $region11: #{tpu_custom_call.1} parent=5 // pred_region
        %s237 = ssub.s32 %s22, 1
        // Predicated region
        $region13: #{tpu_custom_call.1} parent=11 // pred_check
          %p238 = pneg %p90
        $region14: #{tpu_custom_call.1} parent=11 // pred_check_branch
          %240 = sbr.rel (%p238) target = $region16
        $region15: #{tpu_custom_call.1} parent=11 // pred_region
          %s242 = ssub.s32 256, 256
          %243 = vsyncadd [#allocation12], %s242
          %s244 = sshll.u32 [#allocation11], 4
          %s245 = int_to_ptr.vmem [resolvable:$true] %s244
          %250 = dma.hbm_to_vmem [thread:$0]  %s1, 256, %s245, [#allocation12], 64, 64, 4
        $region16: #{tpu_custom_call.1} parent=11 // pred_fallthru
          _
        // Predicated region
        $region17: #{tpu_custom_call.1} parent=11 // pred_check
          %p251 = pneg %p111
        $region18: #{tpu_custom_call.1} parent=11 // pred_check_branch
          %253 = sbr.rel (%p251) target = $region20
        $region19: #{tpu_custom_call.1} parent=11 // pred_region
          %s255 = ssub.s32 16, 16
          %256 = vsyncadd [#allocation12], %s255
          %s258 = sshll.u32 [#allocation13], 4
          %s259 = int_to_ptr.vmem [resolvable:$true] %s258
          %261 = dma.hbm_to_vmem [thread:$0]  %s2, 16, %s259, [#allocation12]
        $region20: #{tpu_custom_call.1} parent=11 // pred_fallthru
          _
        // Predicated region
        $region21: #{tpu_custom_call.1} parent=11 // pred_check
          %p262 = pneg %p132
        $region22: #{tpu_custom_call.1} parent=11 // pred_check_branch
          %264 = sbr.rel (%p262) target = $region24
        $region23: #{tpu_custom_call.1} parent=11 // pred_region
          %s266 = ssub.s32 256, 256
          %267 = vsyncadd [#allocation15], %s266
          %s268 = sshll.u32 [#allocation14], 4
          %s269 = int_to_ptr.vmem [resolvable:$true] %s268
          %274 = dma.hbm_to_vmem [thread:$0]  %s3, 256, %s269, [#allocation15], 64, 64, 4
        $region24: #{tpu_custom_call.1} parent=11 // pred_fallthru
          _
        // Predicated region
        $region25: #{tpu_custom_call.1} parent=11 // pred_check
          %p275 = pneg %p153
        $region26: #{tpu_custom_call.1} parent=11 // pred_check_branch
          %277 = sbr.rel (%p275) target = $region28
        $region27: #{tpu_custom_call.1} parent=11 // pred_region
          %s279 = ssub.s32 16, 16
          %280 = vsyncadd [#allocation15], %s279
          %s282 = sshll.u32 [#allocation16], 4
          %s283 = int_to_ptr.vmem [resolvable:$true] %s282
          %285 = dma.hbm_to_vmem [thread:$0]  %s4, 16, %s283, [#allocation15]
        $region28: #{tpu_custom_call.1} parent=11 // pred_fallthru
          _
        // Predicated region
        $region29: #{tpu_custom_call.1} parent=11 // pred_check
          %p286 = pneg %p174
        $region30: #{tpu_custom_call.1} parent=11 // pred_check_branch
          %288 = sbr.rel (%p286) target = $region32
        $region31: #{tpu_custom_call.1} parent=11 // pred_region
          %s290 = ssub.s32 256, 256
          %291 = vsyncadd [#allocation18], %s290
          %s292 = sshll.u32 [#allocation17], 4
          %s293 = int_to_ptr.vmem [resolvable:$true] %s292
          %298 = dma.hbm_to_vmem [thread:$0]  %s5, 256, %s293, [#allocation18], 64, 64, 4
        $region32: #{tpu_custom_call.1} parent=11 // pred_fallthru
          _
        // Predicated region
        $region33: #{tpu_custom_call.1} parent=11 // pred_check
          %p299 = pneg %p195
        $region34: #{tpu_custom_call.1} parent=11 // pred_check_branch
          %301 = sbr.rel (%p299) target = $region36
        $region35: #{tpu_custom_call.1} parent=11 // pred_region
          %s303 = ssub.s32 16, 16
          %304 = vsyncadd [#allocation18], %s303
          %s306 = sshll.u32 [#allocation19], 4
          %s307 = int_to_ptr.vmem [resolvable:$true] %s306
          %309 = dma.hbm_to_vmem [thread:$0]  %s6, 16, %s307, [#allocation18]
        $region36: #{tpu_custom_call.1} parent=11 // pred_fallthru
          _
      $region12: #{tpu_custom_call.1} parent=5 // pred_fallthru
        _
      %p310 = scmp.lt.s32.totalorder %s22, 2
      // Predicated region
      $region37: #{tpu_custom_call.1} parent=5 // pred_check
        %p311 = pneg %p310
      $region38: #{tpu_custom_call.1} parent=5 // pred_check_branch
        %313 = sbr.rel (%p311) target = $region40
      $region39: #{tpu_custom_call.1} parent=5 // pred_region
        // Predicated region
        $region41: #{tpu_custom_call.1} parent=39 // pred_check
          %p314 = pneg %p63
        $region42: #{tpu_custom_call.1} parent=39 // pred_check_branch
          %316 = sbr.rel (%p314) target = $region44
        $region43: #{tpu_custom_call.1} parent=39 // pred_region
          %s317 = sand.u32 %s53, 1
          %s318 = scalar_lea.sflag [#allocation9], %s317
          %s319 = sand.u32 %s53, 1
          %s320 = smul.addr %s319, 4
          %s321 = scalar_lea.vmem [#allocation8], %s320
          %s323 = ssub.s32 64, 64
          %324 = vsyncadd %s318, %s323
          %s325 = sadd.s32 %s30, %s29
          %s326 = smul.addr %s325, 64
          %s327 = scalar_lea.hbm %s0, %s326
          %s329 = sshll.u32 %s321, 4
          %s330 = int_to_ptr.vmem [resolvable:$true] %s329
          %332 = dma.hbm_to_vmem [thread:$0]  %s327, 64, %s330, %s318
        $region44: #{tpu_custom_call.1} parent=39 // pred_fallthru
          _
      $region40: #{tpu_custom_call.1} parent=5 // pred_fallthru
        _
      %p333 = scmp.le.s32.totalorder 1, %s22
      %p334 = scmp.lt.s32.totalorder %s22, 3
      %p335 = pnand %p333, %p334
      %p336 = pneg %p335
      // Predicated region
      $region45: #{tpu_custom_call.1} parent=5 // pred_check
        _
      $region46: #{tpu_custom_call.1} parent=5 // pred_check_branch
        %338 = sbr.rel (%p335) target = $region48
      $region47: #{tpu_custom_call.1} parent=5 // pred_region
        %s339 = ssub.s32 %s22, 1
        %s340 = sand.u32 %s56, 1
        %s341 = scalar_lea.sflag [#allocation9], %s340
        %s342 = sand.u32 %s56, 1
        %s343 = smul.addr %s342, 4
        %s344 = scalar_lea.vmem [#allocation8], %s343
        // Predicated region
        $region49: #{tpu_custom_call.1} parent=47 // pred_check
          %p345 = pneg %p69
        $region50: #{tpu_custom_call.1} parent=47 // pred_check_branch
          %347 = sbr.rel (%p345) target = $region52
        $region51: #{tpu_custom_call.1} parent=47 // pred_region
          %348 = dma.done %s341, 64
        $region52: #{tpu_custom_call.1} parent=47 // pred_fallthru
          _
        // Predicated region
        $region53: #{tpu_custom_call.1} parent=47 // pred_check
          %p349 = pneg %p90
        $region54: #{tpu_custom_call.1} parent=47 // pred_check_branch
          %351 = sbr.rel (%p349) target = $region56
        $region55: #{tpu_custom_call.1} parent=47 // pred_region
          %352 = dma.done [#allocation12], 256
        $region56: #{tpu_custom_call.1} parent=47 // pred_fallthru
          _
        // Predicated region
        $region57: #{tpu_custom_call.1} parent=47 // pred_check
          %p353 = pneg %p111
        $region58: #{tpu_custom_call.1} parent=47 // pred_check_branch
          %355 = sbr.rel (%p353) target = $region60
        $region59: #{tpu_custom_call.1} parent=47 // pred_region
          %356 = dma.done [#allocation12], 16
        $region60: #{tpu_custom_call.1} parent=47 // pred_fallthru
          _
        // Predicated region
        $region61: #{tpu_custom_call.1} parent=47 // pred_check
          %p357 = pneg %p132
        $region62: #{tpu_custom_call.1} parent=47 // pred_check_branch
          %359 = sbr.rel (%p357) target = $region64
        $region63: #{tpu_custom_call.1} parent=47 // pred_region
          %360 = dma.done [#allocation15], 256
        $region64: #{tpu_custom_call.1} parent=47 // pred_fallthru
          _
        // Predicated region
        $region65: #{tpu_custom_call.1} parent=47 // pred_check
          %p361 = pneg %p153
        $region66: #{tpu_custom_call.1} parent=47 // pred_check_branch
          %363 = sbr.rel (%p361) target = $region68
        $region67: #{tpu_custom_call.1} parent=47 // pred_region
          %364 = dma.done [#allocation15], 16
        $region68: #{tpu_custom_call.1} parent=47 // pred_fallthru
          _
        // Predicated region
        $region69: #{tpu_custom_call.1} parent=47 // pred_check
          %p365 = pneg %p174
        $region70: #{tpu_custom_call.1} parent=47 // pred_check_branch
          %367 = sbr.rel (%p365) target = $region72
        $region71: #{tpu_custom_call.1} parent=47 // pred_region
          %368 = dma.done [#allocation18], 256
        $region72: #{tpu_custom_call.1} parent=47 // pred_fallthru
          _
        // Predicated region
        $region73: #{tpu_custom_call.1} parent=47 // pred_check
          %p369 = pneg %p195
        $region74: #{tpu_custom_call.1} parent=47 // pred_check_branch
          %371 = sbr.rel (%p369) target = $region76
        $region75: #{tpu_custom_call.1} parent=47 // pred_region
          %372 = dma.done [#allocation18], 16
        $region76: #{tpu_custom_call.1} parent=47 // pred_fallthru
          _
        %s373 = sand.u32 %s56, 1
        %s374 = scalar_lea.sflag [#allocation9], %s373
        %s375 = sand.u32 %s56, 1
        %s376 = smul.addr %s375, 4
        %s377 = scalar_lea.vmem [#allocation8], %s376
        %p378 = pneg %p69
        %p379 = pneg %p66
        %p380 = pneg %p90
        %p381 = pneg %p87
        %p382 = pneg %p111
        %p383 = pneg %p108
        %p384 = pneg %p132
        %p385 = pneg %p129
        %p386 = pneg %p153
        %p387 = pneg %p150
        %p388 = pneg %p174
        %p389 = pneg %p171
        %p390 = pneg %p195
        %p391 = pneg %p192
        %p392 = pneg %p223
        %p393 = pneg %p220
        %s394 = sand.u32 %s210, 1
        %s395 = scalar_lea.sflag [#allocation10], %s394
        %s396 = sand.u32 %s210, 1
        %s397 = smul.addr %s396, 8
        %s398 = scalar_lea.vmem [#allocation20], %s397
        %p400 = scmp.eq.s32.totalorder %s34, 0
        // Predicated region
        $region77: #{tpu_custom_call.1} parent=47 // pred_check
          %p401 = pneg %p400
        $region78: #{tpu_custom_call.1} parent=47 // pred_check_branch
          %403 = sbr.rel (%p401) target = $region80
        $region79: #{tpu_custom_call.1} parent=47 // pred_region
          %vm404 = vcmask 7168
          %405 = vst.msk [vmem:[#allocation5] sm:$0xff] %vm404, -1e+30
          %406 = vst.msk [vmem:[#allocation5 + $0x8] sm:$0xff] %vm404, -1e+30
          %407 = vst.msk [vmem:[#allocation5 + $0x10] sm:$0xff] %vm404, -1e+30
          %408 = vst.msk [vmem:[#allocation5 + $0x18] sm:$0xff] %vm404, -1e+30
          %409 = vst.msk [vmem:[#allocation6] sm:$0xff] %vm404, 0.0
          %410 = vst.msk [vmem:[#allocation6 + $0x8] sm:$0xff] %vm404, 0.0
          %411 = vst.msk [vmem:[#allocation6 + $0x10] sm:$0xff] %vm404, 0.0
          %412 = vst.msk [vmem:[#allocation6 + $0x18] sm:$0xff] %vm404, 0.0
          %vm413 = vcmask 64512
          %414 = vst.msk [vmem:[#allocation7] sm:$0xff] %vm413, 0.0
          %415 = vst.msk [vmem:[#allocation7 + $0x8] sm:$0xff] %vm413, 0.0
          %416 = vst.msk [vmem:[#allocation7 + $0x10] sm:$0xff] %vm413, 0.0
          %417 = vst.msk [vmem:[#allocation7 + $0x18] sm:$0xff] %vm413, 0.0
          %v418 = vld [vmem:[%s344] sm:$0xf]
          %v419 = vld [vmem:[#allocation11] sm:$0xf]
          %v420 = vld [vmem:[#allocation11 + $0x4] sm:$0xf]
          %v421 = vld [vmem:[#allocation11 + $0x8] sm:$0xf]
          %v422 = vld [vmem:[#allocation11 + $0xc] sm:$0xf]
          %v423 = vld [vmem:[#allocation13] sm:$0x1]
          %v425 = vlaneseq
          %v426 = vshrl.u32 %v425, 7
          %v427 = vsub.s32 0, %v426
          %v428 = vrot.slane %v423, %v427
          %v434 = vunpack.c.l.b16 %v419
          %v435 = vunpack.c.l.b16 %v420
          %v436 = vunpack.c.l.b16 %v421
          %v437 = vunpack.c.l.b16 %v422
          %v438 = vpack.c.b16 %v435, %v434
          %v439 = vpack.c.b16 %v437, %v436
          %vm442 = vcmask 261120
          %v444 = vsel %vm442, %v418, 0
          %446 = vmatprep.subr.bf16.mxu0 0
          %447 = vmatpush1.bf16.msra.mxu0 %v438
          %448 = vmatprep.subr.bf16.mxu0 0
          %449 = vmatpush1.bf16.msra.mxu0 %v439
          %450 = vmatprep.subr.bf16.mxu0 0
          %451 = vmatpush1.bf16.msra.mxu0 0
          %452 = vmatprep.subr.bf16.mxu0 0
          %453 = vmatpush1.bf16.msra.mxu0 0
          %454 = vmatprep.subr.bf16.mxu0 0
          %455 = vmatpush1.bf16.msra.mxu0 0
          %456 = vmatprep.subr.bf16.mxu0 0
          %457 = vmatpush1.bf16.msra.mxu0 0
          %458 = vmatprep.subr.bf16.mxu0 0
          %459 = vmatpush1.bf16.msra.mxu0 0
          %460 = vmatprep.subr.bf16.mxu0 0
          %461 = vmatpush1.bf16.msra.mxu0 0
          %462 = vmatprep.subr.bf16.mxu0 0
          %463 = vmatpush1.bf16.msra.mxu0 0
          %464 = vmatprep.subr.bf16.mxu0 0
          %465 = vmatpush1.bf16.msra.mxu0 0
          %466 = vmatprep.subr.bf16.mxu0 0
          %467 = vmatpush1.bf16.msra.mxu0 0
          %468 = vmatprep.subr.bf16.mxu0 0
          %469 = vmatpush1.bf16.msra.mxu0 0
          %470 = vmatprep.subr.bf16.mxu0 0
          %471 = vmatpush1.bf16.msra.mxu0 0
          %472 = vmatprep.subr.bf16.mxu0 0
          %473 = vmatpush1.bf16.msra.mxu0 0
          %474 = vmatprep.subr.bf16.mxu0 0
          %475 = vmatpush1.bf16.msra.mxu0 0
          %476 = vmatprep.subr.bf16.mxu0 0
          %477 = vmatpush1.bf16.msra.mxu0 0
          %478 = vmatprep.mubr.bf16.mxu0 0
          %479 = vmatmul.mubr.bf16.gmra.mrb[0].mxu0 %v444
          %v480 = vpop.f32.mrb[0].mxu0
          %v481 = vadd.f32 %v428, %v480
          %v482 = vpop.f32.mrb[0].mxu0
          %v483 = vpop.f32.mrb[0].mxu0
          %v484 = vpop.f32.mrb[0].mxu0
          %485 = vdwg.mxu0
          %v486 = vmul.f32 %v481, 0.35355338
          %488 = vrot.lane.b32.xlu0 %v486, 120
          %v489 = vpop.permute.xlu0 %488
          %491 = vrot.lane.b32.xlu0 %v486, 112
          %v492 = vpop.permute.xlu0 %491
          %494 = vrot.lane.b32.xlu0 %v486, 104
          %v495 = vpop.permute.xlu0 %494
          %v497 = vcombine.low %v486, %v492
          %v498 = vcombine.high %v486, %v492
          %v500 = vunpack.c.l.s4 1983009808
          %v501 = vunpack.c.0.s8 %v500
          %v502 = vlaneseq
          %v503 = vshrl.u32 %v502, 7
          %v504 = vsub.s32 %v501, %v503
          %v505 = vrot.slane %v497, %v504
          %v507 = vunpack.c.l.s4 1983009808
          %v508 = vunpack.c.0.s8 %v507
          %v509 = vlaneseq
          %v510 = vshrl.u32 %v509, 7
          %v511 = vsub.s32 %v508, %v510
          %v512 = vrot.slane %v498, %v511
          %v513 = vcombine.low %v489, %v495
          %v514 = vcombine.high %v489, %v495
          %v516 = vunpack.c.l.s4 1983009808
          %v517 = vunpack.c.0.s8 %v516
          %v518 = vlaneseq
          %v519 = vshrl.u32 %v518, 7
          %v520 = vsub.s32 %v517, %v519
          %v521 = vrot.slane %v513, %v520
          %v523 = vunpack.c.l.s4 1983009808
          %v524 = vunpack.c.0.s8 %v523
          %v525 = vlaneseq
          %v526 = vshrl.u32 %v525, 7
          %v527 = vsub.s32 %v524, %v526
          %v528 = vrot.slane %v514, %v527
          %v529 = vcombine.low %v505, %v521
          %v530 = vcombine.high %v505, %v521
          %v532 = vunpack.c.l.s4 1934713408
          %v533 = vunpack.c.0.s8 %v532
          %v534 = vlaneseq
          %v535 = vshrl.u32 %v534, 7
          %v536 = vsub.s32 %v533, %v535
          %v537 = vrot.slane %v529, %v536
          %v539 = vunpack.c.l.s4 1934713408
          %v540 = vunpack.c.0.s8 %v539
          %v541 = vlaneseq
          %v542 = vshrl.u32 %v541, 7
          %v543 = vsub.s32 %v540, %v542
          %v544 = vrot.slane %v530, %v543
          %v545 = vcombine.low %v512, %v528
          %v546 = vcombine.high %v512, %v528
          %v548 = vunpack.c.l.s4 1934713408
          %v549 = vunpack.c.0.s8 %v548
          %v550 = vlaneseq
          %v551 = vshrl.u32 %v550, 7
          %v552 = vsub.s32 %v549, %v551
          %v553 = vrot.slane %v545, %v552
          %v555 = vunpack.c.l.s4 1934713408
          %v556 = vunpack.c.0.s8 %v555
          %v557 = vlaneseq
          %v558 = vshrl.u32 %v557, 7
          %v559 = vsub.s32 %v556, %v558
          %v560 = vrot.slane %v546, %v559
          %v561 = vcombine.high %v537, 0.0
          %v562 = vcombine.high %v544, 0.0
          %v563 = vcombine.high %v553, 0.0
          %v564 = vcombine.high %v560, 0.0
          %v565 = vcombine.low %v537, %v544
          %v567 = vunpack.c.l.s4 1983009808
          %v568 = vunpack.c.0.s8 %v567
          %v569 = vlaneseq
          %v570 = vshrl.u32 %v569, 7
          %v571 = vsub.s32 %v568, %v570
          %v572 = vrot.slane %v565, %v571
          %v573 = vcombine.low %v561, %v562
          %v575 = vunpack.c.l.s4 1983009808
          %v576 = vunpack.c.0.s8 %v575
          %v577 = vlaneseq
          %v578 = vshrl.u32 %v577, 7
          %v579 = vsub.s32 %v576, %v578
          %v580 = vrot.slane %v573, %v579
          %v581 = vcombine.low %v553, %v560
          %v583 = vunpack.c.l.s4 1983009808
          %v584 = vunpack.c.0.s8 %v583
          %v585 = vlaneseq
          %v586 = vshrl.u32 %v585, 7
          %v587 = vsub.s32 %v584, %v586
          %v588 = vrot.slane %v581, %v587
          %v589 = vcombine.low %v563, %v564
          %v591 = vunpack.c.l.s4 1983009808
          %v592 = vunpack.c.0.s8 %v591
          %v593 = vlaneseq
          %v594 = vshrl.u32 %v593, 7
          %v595 = vsub.s32 %v592, %v594
          %v596 = vrot.slane %v589, %v595
          %v597 = vcombine.low %v572, %v580
          %v598 = vcombine.high %v572, %v580
          %v600 = vunpack.c.l.s4 1934713408
          %v601 = vunpack.c.0.s8 %v600
          %v602 = vlaneseq
          %v603 = vshrl.u32 %v602, 7
          %v604 = vsub.s32 %v601, %v603
          %v605 = vrot.slane %v597, %v604
          %v607 = vunpack.c.l.s4 1934713408
          %v608 = vunpack.c.0.s8 %v607
          %v609 = vlaneseq
          %v610 = vshrl.u32 %v609, 7
          %v611 = vsub.s32 %v608, %v610
          %v612 = vrot.slane %v598, %v611
          %v613 = vcombine.low %v588, %v596
          %v614 = vcombine.high %v588, %v596
          %v616 = vunpack.c.l.s4 1934713408
          %v617 = vunpack.c.0.s8 %v616
          %v618 = vlaneseq
          %v619 = vshrl.u32 %v618, 7
          %v620 = vsub.s32 %v617, %v619
          %v621 = vrot.slane %v613, %v620
          %v623 = vunpack.c.l.s4 1934713408
          %v624 = vunpack.c.0.s8 %v623
          %v625 = vlaneseq
          %v626 = vshrl.u32 %v625, 7
          %v627 = vsub.s32 %v624, %v626
          %v628 = vrot.slane %v614, %v627
          %v629 = vcombine.low %v605, %v621
          %v630 = vcombine.high %v605, %v621
          %v631 = vcombine.low %v612, %v628
          %v632 = vcombine.high %v612, %v628
          %v633 = vpack.c.bf16 %v629, %v629
          %v634 = vpack.c.bf16 %v630, %v630
          %v635 = vpack.c.bf16 %v631, %v631
          %v636 = vpack.c.bf16 %v632, %v632
          %vm637 = vcmask 60416
          %638 = vst.msk [vmem:[#allocation2] sm:$0xf] %vm637, %v633
          %639 = vst.msk [vmem:[#allocation2 + $0x4] sm:$0xf] %vm637, %v634
          %640 = vst.msk [vmem:[#allocation2 + $0x8] sm:$0xf] %vm637, %v635
          %641 = vst.msk [vmem:[#allocation2 + $0xc] sm:$0xf] %vm637, %v636
        $region80: #{tpu_custom_call.1} parent=47 // pred_fallthru
          _
        %p642 = scmp.eq.s32.totalorder %s34, %s33
        // Predicated region
        $region81: #{tpu_custom_call.1} parent=47 // pred_check
          %p643 = pneg %p642
        $region82: #{tpu_custom_call.1} parent=47 // pred_check_branch
          %645 = sbr.rel (%p643) target = $region84
        $region83: #{tpu_custom_call.1} parent=47 // pred_region
          %v646 = vld [vmem:[%s344] sm:$0xf]
          %v647 = vld [vmem:[#allocation14] sm:$0xf]
          %v648 = vld [vmem:[#allocation14 + $0x4] sm:$0xf]
          %v649 = vld [vmem:[#allocation14 + $0x8] sm:$0xf]
          %v650 = vld [vmem:[#allocation14 + $0xc] sm:$0xf]
          %v651 = vld [vmem:[#allocation16] sm:$0x1]
          %v653 = vlaneseq
          %v654 = vshrl.u32 %v653, 7
          %v655 = vsub.s32 0, %v654
          %v656 = vrot.slane %v651, %v655
          %v662 = vunpack.c.l.b16 %v647
          %v663 = vunpack.c.l.b16 %v648
          %v664 = vunpack.c.l.b16 %v649
          %v665 = vunpack.c.l.b16 %v650
          %v666 = vpack.c.b16 %v663, %v662
          %v667 = vpack.c.b16 %v665, %v664
          %vm670 = vcmask 261120
          %v672 = vsel %vm670, %v646, 0
          %674 = vmatprep.subr.bf16.mxu0 0
          %675 = vmatpush1.bf16.msra.mxu0 %v666
          %676 = vmatprep.subr.bf16.mxu0 0
          %677 = vmatpush1.bf16.msra.mxu0 %v667
          %678 = vmatprep.subr.bf16.mxu0 0
          %679 = vmatpush1.bf16.msra.mxu0 0
          %680 = vmatprep.subr.bf16.mxu0 0
          %681 = vmatpush1.bf16.msra.mxu0 0
          %682 = vmatprep.subr.bf16.mxu0 0
          %683 = vmatpush1.bf16.msra.mxu0 0
          %684 = vmatprep.subr.bf16.mxu0 0
          %685 = vmatpush1.bf16.msra.mxu0 0
          %686 = vmatprep.subr.bf16.mxu0 0
          %687 = vmatpush1.bf16.msra.mxu0 0
          %688 = vmatprep.subr.bf16.mxu0 0
          %689 = vmatpush1.bf16.msra.mxu0 0
          %690 = vmatprep.subr.bf16.mxu0 0
          %691 = vmatpush1.bf16.msra.mxu0 0
          %692 = vmatprep.subr.bf16.mxu0 0
          %693 = vmatpush1.bf16.msra.mxu0 0
          %694 = vmatprep.subr.bf16.mxu0 0
          %695 = vmatpush1.bf16.msra.mxu0 0
          %696 = vmatprep.subr.bf16.mxu0 0
          %697 = vmatpush1.bf16.msra.mxu0 0
          %698 = vmatprep.subr.bf16.mxu0 0
          %699 = vmatpush1.bf16.msra.mxu0 0
          %700 = vmatprep.subr.bf16.mxu0 0
          %701 = vmatpush1.bf16.msra.mxu0 0
          %702 = vmatprep.subr.bf16.mxu0 0
          %703 = vmatpush1.bf16.msra.mxu0 0
          %704 = vmatprep.subr.bf16.mxu0 0
          %705 = vmatpush1.bf16.msra.mxu0 0
          %706 = vmatprep.mubr.bf16.mxu0 0
          %707 = vmatmul.mubr.bf16.gmra.mrb[0].mxu0 %v672
          %v708 = vpop.f32.mrb[0].mxu0
          %v709 = vadd.f32 %v656, %v708
          %v710 = vpop.f32.mrb[0].mxu0
          %v711 = vpop.f32.mrb[0].mxu0
          %v712 = vpop.f32.mrb[0].mxu0
          %713 = vdwg.mxu0
          %715 = vrot.lane.b32.xlu0 %v709, 120
          %v716 = vpop.permute.xlu0 %715
          %718 = vrot.lane.b32.xlu0 %v709, 112
          %v719 = vpop.permute.xlu0 %718
          %721 = vrot.lane.b32.xlu0 %v709, 104
          %v722 = vpop.permute.xlu0 %721
          %v724 = vcombine.low %v709, %v719
          %v725 = vcombine.high %v709, %v719
          %v727 = vunpack.c.l.s4 1983009808
          %v728 = vunpack.c.0.s8 %v727
          %v729 = vlaneseq
          %v730 = vshrl.u32 %v729, 7
          %v731 = vsub.s32 %v728, %v730
          %v732 = vrot.slane %v724, %v731
          %v734 = vunpack.c.l.s4 1983009808
          %v735 = vunpack.c.0.s8 %v734
          %v736 = vlaneseq
          %v737 = vshrl.u32 %v736, 7
          %v738 = vsub.s32 %v735, %v737
          %v739 = vrot.slane %v725, %v738
          %v740 = vcombine.low %v716, %v722
          %v741 = vcombine.high %v716, %v722
          %v743 = vunpack.c.l.s4 1983009808
          %v744 = vunpack.c.0.s8 %v743
          %v745 = vlaneseq
          %v746 = vshrl.u32 %v745, 7
          %v747 = vsub.s32 %v744, %v746
          %v748 = vrot.slane %v740, %v747
          %v750 = vunpack.c.l.s4 1983009808
          %v751 = vunpack.c.0.s8 %v750
          %v752 = vlaneseq
          %v753 = vshrl.u32 %v752, 7
          %v754 = vsub.s32 %v751, %v753
          %v755 = vrot.slane %v741, %v754
          %v756 = vcombine.low %v732, %v748
          %v757 = vcombine.high %v732, %v748
          %v759 = vunpack.c.l.s4 1934713408
          %v760 = vunpack.c.0.s8 %v759
          %v761 = vlaneseq
          %v762 = vshrl.u32 %v761, 7
          %v763 = vsub.s32 %v760, %v762
          %v764 = vrot.slane %v756, %v763
          %v766 = vunpack.c.l.s4 1934713408
          %v767 = vunpack.c.0.s8 %v766
          %v768 = vlaneseq
          %v769 = vshrl.u32 %v768, 7
          %v770 = vsub.s32 %v767, %v769
          %v771 = vrot.slane %v757, %v770
          %v772 = vcombine.low %v739, %v755
          %v773 = vcombine.high %v739, %v755
          %v775 = vunpack.c.l.s4 1934713408
          %v776 = vunpack.c.0.s8 %v775
          %v777 = vlaneseq
          %v778 = vshrl.u32 %v777, 7
          %v779 = vsub.s32 %v776, %v778
          %v780 = vrot.slane %v772, %v779
          %v782 = vunpack.c.l.s4 1934713408
          %v783 = vunpack.c.0.s8 %v782
          %v784 = vlaneseq
          %v785 = vshrl.u32 %v784, 7
          %v786 = vsub.s32 %v783, %v785
          %v787 = vrot.slane %v773, %v786
          %v788 = vcombine.high %v764, 0.0
          %v789 = vcombine.high %v771, 0.0
          %v790 = vcombine.high %v780, 0.0
          %v791 = vcombine.high %v787, 0.0
          %v792 = vcombine.low %v764, %v771
          %v794 = vunpack.c.l.s4 1983009808
          %v795 = vunpack.c.0.s8 %v794
          %v796 = vlaneseq
          %v797 = vshrl.u32 %v796, 7
          %v798 = vsub.s32 %v795, %v797
          %v799 = vrot.slane %v792, %v798
          %v800 = vcombine.low %v788, %v789
          %v802 = vunpack.c.l.s4 1983009808
          %v803 = vunpack.c.0.s8 %v802
          %v804 = vlaneseq
          %v805 = vshrl.u32 %v804, 7
          %v806 = vsub.s32 %v803, %v805
          %v807 = vrot.slane %v800, %v806
          %v808 = vcombine.low %v780, %v787
          %v810 = vunpack.c.l.s4 1983009808
          %v811 = vunpack.c.0.s8 %v810
          %v812 = vlaneseq
          %v813 = vshrl.u32 %v812, 7
          %v814 = vsub.s32 %v811, %v813
          %v815 = vrot.slane %v808, %v814
          %v816 = vcombine.low %v790, %v791
          %v818 = vunpack.c.l.s4 1983009808
          %v819 = vunpack.c.0.s8 %v818
          %v820 = vlaneseq
          %v821 = vshrl.u32 %v820, 7
          %v822 = vsub.s32 %v819, %v821
          %v823 = vrot.slane %v816, %v822
          %v824 = vcombine.low %v799, %v807
          %v825 = vcombine.high %v799, %v807
          %v827 = vunpack.c.l.s4 1934713408
          %v828 = vunpack.c.0.s8 %v827
          %v829 = vlaneseq
          %v830 = vshrl.u32 %v829, 7
          %v831 = vsub.s32 %v828, %v830
          %v832 = vrot.slane %v824, %v831
          %v834 = vunpack.c.l.s4 1934713408
          %v835 = vunpack.c.0.s8 %v834
          %v836 = vlaneseq
          %v837 = vshrl.u32 %v836, 7
          %v838 = vsub.s32 %v835, %v837
          %v839 = vrot.slane %v825, %v838
          %v840 = vcombine.low %v815, %v823
          %v841 = vcombine.high %v815, %v823
          %v843 = vunpack.c.l.s4 1934713408
          %v844 = vunpack.c.0.s8 %v843
          %v845 = vlaneseq
          %v846 = vshrl.u32 %v845, 7
          %v847 = vsub.s32 %v844, %v846
          %v848 = vrot.slane %v840, %v847
          %v850 = vunpack.c.l.s4 1934713408
          %v851 = vunpack.c.0.s8 %v850
          %v852 = vlaneseq
          %v853 = vshrl.u32 %v852, 7
          %v854 = vsub.s32 %v851, %v853
          %v855 = vrot.slane %v841, %v854
          %v856 = vcombine.low %v832, %v848
          %v857 = vcombine.high %v832, %v848
          %v858 = vcombine.low %v839, %v855
          %v859 = vcombine.high %v839, %v855
          %v860 = vpack.c.bf16 %v856, %v856
          %v861 = vpack.c.bf16 %v857, %v857
          %v862 = vpack.c.bf16 %v858, %v858
          %v863 = vpack.c.bf16 %v859, %v859
          %s864 = smul.u32 %s34, 4
          %s865 = smul.addr %s864, 4
          %s866 = scalar_lea.vmem [#allocation3], %s865
          %vm867 = vcmask 60416
          %868 = vst.msk [vmem:[%s866] sm:$0xf] %vm867, %v860
          %869 = vst.msk [vmem:[%s866 + $0x4] sm:$0xf] %vm867, %v861
          %870 = vst.msk [vmem:[%s866 + $0x8] sm:$0xf] %vm867, %v862
          %871 = vst.msk [vmem:[%s866 + $0xc] sm:$0xf] %vm867, %v863
          %872 = vrot.lane.b32.xlu0 %v709, 96
          %v873 = vpop.permute.xlu0 %872
          %874 = vrot.lane.b32.xlu0 %v716, 96
          %v875 = vpop.permute.xlu0 %874
          %876 = vrot.lane.b32.xlu0 %v719, 96
          %v877 = vpop.permute.xlu0 %876
          %878 = vrot.lane.b32.xlu0 %v722, 96
          %v879 = vpop.permute.xlu0 %878
          %v884 = vcombine.low %v873, %v877
          %v885 = vcombine.high %v873, %v877
          %v887 = vunpack.c.l.s4 1983009808
          %v888 = vunpack.c.0.s8 %v887
          %v889 = vlaneseq
          %v890 = vshrl.u32 %v889, 7
          %v891 = vsub.s32 %v888, %v890
          %v892 = vrot.slane %v884, %v891
          %v894 = vunpack.c.l.s4 1983009808
          %v895 = vunpack.c.0.s8 %v894
          %v896 = vlaneseq
          %v897 = vshrl.u32 %v896, 7
          %v898 = vsub.s32 %v895, %v897
          %v899 = vrot.slane %v885, %v898
          %v900 = vcombine.low %v875, %v879
          %v901 = vcombine.high %v875, %v879
          %v903 = vunpack.c.l.s4 1983009808
          %v904 = vunpack.c.0.s8 %v903
          %v905 = vlaneseq
          %v906 = vshrl.u32 %v905, 7
          %v907 = vsub.s32 %v904, %v906
          %v908 = vrot.slane %v900, %v907
          %v910 = vunpack.c.l.s4 1983009808
          %v911 = vunpack.c.0.s8 %v910
          %v912 = vlaneseq
          %v913 = vshrl.u32 %v912, 7
          %v914 = vsub.s32 %v911, %v913
          %v915 = vrot.slane %v901, %v914
          %v916 = vcombine.low %v892, %v908
          %v917 = vcombine.high %v892, %v908
          %v919 = vunpack.c.l.s4 1934713408
          %v920 = vunpack.c.0.s8 %v919
          %v921 = vlaneseq
          %v922 = vshrl.u32 %v921, 7
          %v923 = vsub.s32 %v920, %v922
          %v924 = vrot.slane %v916, %v923
          %v926 = vunpack.c.l.s4 1934713408
          %v927 = vunpack.c.0.s8 %v926
          %v928 = vlaneseq
          %v929 = vshrl.u32 %v928, 7
          %v930 = vsub.s32 %v927, %v929
          %v931 = vrot.slane %v917, %v930
          %v932 = vcombine.low %v899, %v915
          %v933 = vcombine.high %v899, %v915
          %v935 = vunpack.c.l.s4 1934713408
          %v936 = vunpack.c.0.s8 %v935
          %v937 = vlaneseq
          %v938 = vshrl.u32 %v937, 7
          %v939 = vsub.s32 %v936, %v938
          %v940 = vrot.slane %v932, %v939
          %v942 = vunpack.c.l.s4 1934713408
          %v943 = vunpack.c.0.s8 %v942
          %v944 = vlaneseq
          %v945 = vshrl.u32 %v944, 7
          %v946 = vsub.s32 %v943, %v945
          %v947 = vrot.slane %v933, %v946
          %v948 = vcombine.high %v924, 0.0
          %v949 = vcombine.high %v931, 0.0
          %v950 = vcombine.high %v940, 0.0
          %v951 = vcombine.high %v947, 0.0
          %v952 = vcombine.low %v924, %v931
          %v954 = vunpack.c.l.s4 1983009808
          %v955 = vunpack.c.0.s8 %v954
          %v956 = vlaneseq
          %v957 = vshrl.u32 %v956, 7
          %v958 = vsub.s32 %v955, %v957
          %v959 = vrot.slane %v952, %v958
          %v960 = vcombine.low %v948, %v949
          %v962 = vunpack.c.l.s4 1983009808
          %v963 = vunpack.c.0.s8 %v962
          %v964 = vlaneseq
          %v965 = vshrl.u32 %v964, 7
          %v966 = vsub.s32 %v963, %v965
          %v967 = vrot.slane %v960, %v966
          %v968 = vcombine.low %v940, %v947
          %v970 = vunpack.c.l.s4 1983009808
          %v971 = vunpack.c.0.s8 %v970
          %v972 = vlaneseq
          %v973 = vshrl.u32 %v972, 7
          %v974 = vsub.s32 %v971, %v973
          %v975 = vrot.slane %v968, %v974
          %v976 = vcombine.low %v950, %v951
          %v978 = vunpack.c.l.s4 1983009808
          %v979 = vunpack.c.0.s8 %v978
          %v980 = vlaneseq
          %v981 = vshrl.u32 %v980, 7
          %v982 = vsub.s32 %v979, %v981
          %v983 = vrot.slane %v976, %v982
          %v984 = vcombine.low %v959, %v967
          %v985 = vcombine.high %v959, %v967
          %v987 = vunpack.c.l.s4 1934713408
          %v988 = vunpack.c.0.s8 %v987
          %v989 = vlaneseq
          %v990 = vshrl.u32 %v989, 7
          %v991 = vsub.s32 %v988, %v990
          %v992 = vrot.slane %v984, %v991
          %v994 = vunpack.c.l.s4 1934713408
          %v995 = vunpack.c.0.s8 %v994
          %v996 = vlaneseq
          %v997 = vshrl.u32 %v996, 7
          %v998 = vsub.s32 %v995, %v997
          %v999 = vrot.slane %v985, %v998
          %v1000 = vcombine.low %v975, %v983
          %v1001 = vcombine.high %v975, %v983
          %v1003 = vunpack.c.l.s4 1934713408
          %v1004 = vunpack.c.0.s8 %v1003
          %v1005 = vlaneseq
          %v1006 = vshrl.u32 %v1005, 7
          %v1007 = vsub.s32 %v1004, %v1006
          %v1008 = vrot.slane %v1000, %v1007
          %v1010 = vunpack.c.l.s4 1934713408
          %v1011 = vunpack.c.0.s8 %v1010
          %v1012 = vlaneseq
          %v1013 = vshrl.u32 %v1012, 7
          %v1014 = vsub.s32 %v1011, %v1013
          %v1015 = vrot.slane %v1001, %v1014
          %v1016 = vcombine.low %v992, %v1008
          %v1017 = vcombine.high %v992, %v1008
          %v1018 = vcombine.low %v999, %v1015
          %v1019 = vcombine.high %v999, %v1015
          %v1020 = vpack.c.bf16 %v1016, %v1016
          %v1021 = vpack.c.bf16 %v1017, %v1017
          %v1022 = vpack.c.bf16 %v1018, %v1018
          %v1023 = vpack.c.bf16 %v1019, %v1019
          %s1024 = smul.addr %s864, 4
          %s1025 = scalar_lea.vmem [#allocation4], %s1024
          %1026 = vst.msk [vmem:[%s1025] sm:$0xf] %vm867, %v1020
          %1027 = vst.msk [vmem:[%s1025 + $0x4] sm:$0xf] %vm867, %v1021
          %1028 = vst.msk [vmem:[%s1025 + $0x8] sm:$0xf] %vm867, %v1022
          %1029 = vst.msk [vmem:[%s1025 + $0xc] sm:$0xf] %vm867, %v1023
        $region84: #{tpu_custom_call.1} parent=47 // pred_fallthru
          _
        %p1030 = scmp.le.s32.totalorder %s34, %s33
        // Predicated region
        $region85: #{tpu_custom_call.1} parent=47 // pred_check
          %p1031 = pneg %p1030
        $region86: #{tpu_custom_call.1} parent=47 // pred_check_branch
          %1033 = sbr.rel (%p1031) target = $region88
        $region87: #{tpu_custom_call.1} parent=47 // pred_region
          %s1034 = smul.u32 %s34, 4
          %s1035 = smul.addr %s1034, 4
          %s1036 = scalar_lea.vmem [#allocation3], %s1035
          %v1037 = vld [vmem:[%s1036] sm:$0xf]
          %v1038 = vld [vmem:[%s1036 + $0x4] sm:$0xf]
          %v1039 = vld [vmem:[%s1036 + $0x8] sm:$0xf]
          %v1040 = vld [vmem:[%s1036 + $0xc] sm:$0xf]
          %s1041 = smul.addr %s1034, 4
          %s1042 = scalar_lea.vmem [#allocation4], %s1041
          %v1043 = vld [vmem:[%s1042] sm:$0xf]
          %v1044 = vld [vmem:[%s1042 + $0x4] sm:$0xf]
          %v1045 = vld [vmem:[%s1042 + $0x8] sm:$0xf]
          %v1046 = vld [vmem:[%s1042 + $0xc] sm:$0xf]
          %v1047 = vld [vmem:[#allocation2] sm:$0xf]
          %v1048 = vld [vmem:[#allocation2 + $0x4] sm:$0xf]
          %v1049 = vld [vmem:[#allocation2 + $0x8] sm:$0xf]
          %v1050 = vld [vmem:[#allocation2 + $0xc] sm:$0xf]
          %vm1051 = vcmask 64512
          %v1053 = vsel %vm1051, %v1047, 0
          %v1056 = vsel %vm1051, %v1037, 0
          %1058 = vmatprep.subr.bf16.mxu0 0
          %1059 = vmatpush1.bf16.xpose.msra.mxu0 %v1056
          %1060 = vmatprep.subr.bf16.mxu0 0
          %1061 = vmatpush1.bf16.xpose.msra.mxu0 0
          %1062 = vmatprep.subr.bf16.mxu0 0
          %1063 = vmatpush1.bf16.xpose.msra.mxu0 0
          %1064 = vmatprep.subr.bf16.mxu0 0
          %1065 = vmatpush1.bf16.xpose.msra.mxu0 0
          %1066 = vmatprep.subr.bf16.mxu0 0
          %1067 = vmatpush1.bf16.xpose.msra.mxu0 0
          %1068 = vmatprep.subr.bf16.mxu0 0
          %1069 = vmatpush1.bf16.xpose.msra.mxu0 0
          %1070 = vmatprep.subr.bf16.mxu0 0
          %1071 = vmatpush1.bf16.xpose.msra.mxu0 0
          %1072 = vmatprep.subr.bf16.mxu0 0
          %1073 = vmatpush1.bf16.xpose.msra.mxu0 0
          %1074 = vmatprep.subr.bf16.mxu0 0
          %1075 = vmatpush1.bf16.xpose.msra.mxu0 0
          %1076 = vmatprep.subr.bf16.mxu0 0
          %1077 = vmatpush1.bf16.xpose.msra.mxu0 0
          %1078 = vmatprep.subr.bf16.mxu0 0
          %1079 = vmatpush1.bf16.xpose.msra.mxu0 0
          %1080 = vmatprep.subr.bf16.mxu0 0
          %1081 = vmatpush1.bf16.xpose.msra.mxu0 0
          %1082 = vmatprep.subr.bf16.mxu0 0
          %1083 = vmatpush1.bf16.xpose.msra.mxu0 0
          %1084 = vmatprep.subr.bf16.mxu0 0
          %1085 = vmatpush1.bf16.xpose.msra.mxu0 0
          %1086 = vmatprep.subr.bf16.mxu0 0
          %1087 = vmatpush1.bf16.xpose.msra.mxu0 0
          %1088 = vmatprep.subr.bf16.mxu0 0
          %1089 = vmatpush1.bf16.xpose.msra.mxu0 0
          %1090 = vmatprep.mubr.bf16.mxu0 0
          %1091 = vmatmul.mubr.bf16.gmra.mrb[0].mxu0 %v1053
          %v1092 = vpop.f32.mrb[0].mxu0
          %v1093 = vadd.f32 0.0, %v1092
          %v1094 = vpop.f32.mrb[0].mxu0
          %v1095 = vpop.f32.mrb[0].mxu0
          %v1096 = vpop.f32.mrb[0].mxu0
          %1097 = vdwg.mxu0
          %v1099 = vsel %vm1051, %v1048, 0
          %v1102 = vsel %vm1051, %v1038, 0
          %1104 = vmatprep.subr.bf16.mxu0 0
          %1105 = vmatpush1.bf16.xpose.msra.mxu0 %v1102
          %1106 = vmatprep.subr.bf16.mxu0 0
          %1107 = vmatpush1.bf16.xpose.msra.mxu0 0
          %1108 = vmatprep.subr.bf16.mxu0 0
          %1109 = vmatpush1.bf16.xpose.msra.mxu0 0
          %1110 = vmatprep.subr.bf16.mxu0 0
          %1111 = vmatpush1.bf16.xpose.msra.mxu0 0
          %1112 = vmatprep.subr.bf16.mxu0 0
          %1113 = vmatpush1.bf16.xpose.msra.mxu0 0
          %1114 = vmatprep.subr.bf16.mxu0 0
          %1115 = vmatpush1.bf16.xpose.msra.mxu0 0
          %1116 = vmatprep.subr.bf16.mxu0 0
          %1117 = vmatpush1.bf16.xpose.msra.mxu0 0
          %1118 = vmatprep.subr.bf16.mxu0 0
          %1119 = vmatpush1.bf16.xpose.msra.mxu0 0
          %1120 = vmatprep.subr.bf16.mxu0 0
          %1121 = vmatpush1.bf16.xpose.msra.mxu0 0
          %1122 = vmatprep.subr.bf16.mxu0 0
          %1123 = vmatpush1.bf16.xpose.msra.mxu0 0
          %1124 = vmatprep.subr.bf16.mxu0 0
          %1125 = vmatpush1.bf16.xpose.msra.mxu0 0
          %1126 = vmatprep.subr.bf16.mxu0 0
          %1127 = vmatpush1.bf16.xpose.msra.mxu0 0
          %1128 = vmatprep.subr.bf16.mxu0 0
          %1129 = vmatpush1.bf16.xpose.msra.mxu0 0
          %1130 = vmatprep.subr.bf16.mxu0 0
          %1131 = vmatpush1.bf16.xpose.msra.mxu0 0
          %1132 = vmatprep.subr.bf16.mxu0 0
          %1133 = vmatpush1.bf16.xpose.msra.mxu0 0
          %1134 = vmatprep.subr.bf16.mxu0 0
          %1135 = vmatpush1.bf16.xpose.msra.mxu0 0
          %1136 = vmatprep.mubr.bf16.mxu0 0
          %1137 = vmatmul.mubr.bf16.gmra.mrb[0].mxu0 %v1099
          %v1138 = vpop.f32.mrb[0].mxu0
          %v1139 = vadd.f32 0.0, %v1138
          %v1140 = vpop.f32.mrb[0].mxu0
          %v1141 = vpop.f32.mrb[0].mxu0
          %v1142 = vpop.f32.mrb[0].mxu0
          %1143 = vdwg.mxu0
          %v1145 = vsel %vm1051, %v1049, 0
          %v1148 = vsel %vm1051, %v1039, 0
          %1150 = vmatprep.subr.bf16.mxu0 0
          %1151 = vmatpush1.bf16.xpose.msra.mxu0 %v1148
          %1152 = vmatprep.subr.bf16.mxu0 0
          %1153 = vmatpush1.bf16.xpose.msra.mxu0 0
          %1154 = vmatprep.subr.bf16.mxu0 0
          %1155 = vmatpush1.bf16.xpose.msra.mxu0 0
          %1156 = vmatprep.subr.bf16.mxu0 0
          %1157 = vmatpush1.bf16.xpose.msra.mxu0 0
          %1158 = vmatprep.subr.bf16.mxu0 0
          %1159 = vmatpush1.bf16.xpose.msra.mxu0 0
          %1160 = vmatprep.subr.bf16.mxu0 0
          %1161 = vmatpush1.bf16.xpose.msra.mxu0 0
          %1162 = vmatprep.subr.bf16.mxu0 0
          %1163 = vmatpush1.bf16.xpose.msra.mxu0 0
          %1164 = vmatprep.subr.bf16.mxu0 0
          %1165 = vmatpush1.bf16.xpose.msra.mxu0 0
          %1166 = vmatprep.subr.bf16.mxu0 0
          %1167 = vmatpush1.bf16.xpose.msra.mxu0 0
          %1168 = vmatprep.subr.bf16.mxu0 0
          %1169 = vmatpush1.bf16.xpose.msra.mxu0 0
          %1170 = vmatprep.subr.bf16.mxu0 0
          %1171 = vmatpush1.bf16.xpose.msra.mxu0 0
          %1172 = vmatprep.subr.bf16.mxu0 0
          %1173 = vmatpush1.bf16.xpose.msra.mxu0 0
          %1174 = vmatprep.subr.bf16.mxu0 0
          %1175 = vmatpush1.bf16.xpose.msra.mxu0 0
          %1176 = vmatprep.subr.bf16.mxu0 0
          %1177 = vmatpush1.bf16.xpose.msra.mxu0 0
          %1178 = vmatprep.subr.bf16.mxu0 0
          %1179 = vmatpush1.bf16.xpose.msra.mxu0 0
          %1180 = vmatprep.subr.bf16.mxu0 0
          %1181 = vmatpush1.bf16.xpose.msra.mxu0 0
          %1182 = vmatprep.mubr.bf16.mxu0 0
          %1183 = vmatmul.mubr.bf16.gmra.mrb[0].mxu0 %v1145
          %v1184 = vpop.f32.mrb[0].mxu0
          %v1185 = vadd.f32 0.0, %v1184
          %v1186 = vpop.f32.mrb[0].mxu0
          %v1187 = vpop.f32.mrb[0].mxu0
          %v1188 = vpop.f32.mrb[0].mxu0
          %1189 = vdwg.mxu0
          %v1191 = vsel %vm1051, %v1050, 0
          %v1194 = vsel %vm1051, %v1040, 0
          %1196 = vmatprep.subr.bf16.mxu0 0
          %1197 = vmatpush1.bf16.xpose.msra.mxu0 %v1194
          %1198 = vmatprep.subr.bf16.mxu0 0
          %1199 = vmatpush1.bf16.xpose.msra.mxu0 0
          %1200 = vmatprep.subr.bf16.mxu0 0
          %1201 = vmatpush1.bf16.xpose.msra.mxu0 0
          %1202 = vmatprep.subr.bf16.mxu0 0
          %1203 = vmatpush1.bf16.xpose.msra.mxu0 0
          %1204 = vmatprep.subr.bf16.mxu0 0
          %1205 = vmatpush1.bf16.xpose.msra.mxu0 0
          %1206 = vmatprep.subr.bf16.mxu0 0
          %1207 = vmatpush1.bf16.xpose.msra.mxu0 0
          %1208 = vmatprep.subr.bf16.mxu0 0
          %1209 = vmatpush1.bf16.xpose.msra.mxu0 0
          %1210 = vmatprep.subr.bf16.mxu0 0
          %1211 = vmatpush1.bf16.xpose.msra.mxu0 0
          %1212 = vmatprep.subr.bf16.mxu0 0
          %1213 = vmatpush1.bf16.xpose.msra.mxu0 0
          %1214 = vmatprep.subr.bf16.mxu0 0
          %1215 = vmatpush1.bf16.xpose.msra.mxu0 0
          %1216 = vmatprep.subr.bf16.mxu0 0
          %1217 = vmatpush1.bf16.xpose.msra.mxu0 0
          %1218 = vmatprep.subr.bf16.mxu0 0
          %1219 = vmatpush1.bf16.xpose.msra.mxu0 0
          %1220 = vmatprep.subr.bf16.mxu0 0
          %1221 = vmatpush1.bf16.xpose.msra.mxu0 0
          %1222 = vmatprep.subr.bf16.mxu0 0
          %1223 = vmatpush1.bf16.xpose.msra.mxu0 0
          %1224 = vmatprep.subr.bf16.mxu0 0
          %1225 = vmatpush1.bf16.xpose.msra.mxu0 0
          %1226 = vmatprep.subr.bf16.mxu0 0
          %1227 = vmatpush1.bf16.xpose.msra.mxu0 0
          %1228 = vmatprep.mubr.bf16.mxu0 0
          %1229 = vmatmul.mubr.bf16.gmra.mrb[0].mxu0 %v1191
          %v1230 = vpop.f32.mrb[0].mxu0
          %v1231 = vadd.f32 0.0, %v1230
          %v1232 = vpop.f32.mrb[0].mxu0
          %v1233 = vpop.f32.mrb[0].mxu0
          %v1234 = vpop.f32.mrb[0].mxu0
          %1235 = vdwg.mxu0
          %s1236 = smul.u32 %s33, 8
          %v1237 = vlaneseq
          %v1238 = vshrl.u32 %v1237, 7
          %v1239 = vstv %s1236
          %v1240 = vadd.s32 %v1239, %v1238
          %s1241 = smul.u32 %s34, 8
          %v1242 = vlaneseq
          %v1243 = vand.u32 %v1242, 127
          %v1244 = vstv %s1241
          %v1245 = vadd.s32 %v1244, %v1243
          %vm1246 = vcmp.ge.s32.totalorder %v1240, %v1245
          %v1247 = vsel %vm1246, 1, 0
          %vm1248 = vcmp.eq.s32.totalorder %v1247, 1
          %v1249 = vsel %vm1248, %v1093, -1e+30
          %v1250 = vsel %vm1248, %v1139, -1e+30
          %v1251 = vsel %vm1248, %v1185, -1e+30
          %v1252 = vsel %vm1248, %v1231, -1e+30
          %v1253 = vld [vmem:[#allocation5] sm:$0xff]
          %v1254 = vld [vmem:[#allocation5 + $0x8] sm:$0xff]
          %v1255 = vld [vmem:[#allocation5 + $0x10] sm:$0xff]
          %v1256 = vld [vmem:[#allocation5 + $0x18] sm:$0xff]
          %v1257 = vsel %vm1051, %v1249, -inf
          %1258 = vmax.xlane.f32.xlu0 %v1257
          %v1259 = vpop.xlane.xlu0 %1258
          %v1260 = vsel %vm1051, %v1250, -inf
          %1261 = vmax.xlane.f32.xlu0 %v1260
          %v1262 = vpop.xlane.xlu0 %1261
          %v1263 = vsel %vm1051, %v1251, -inf
          %1264 = vmax.xlane.f32.xlu0 %v1263
          %v1265 = vpop.xlane.xlu0 %1264
          %v1266 = vsel %vm1051, %v1252, -inf
          %1267 = vmax.xlane.f32.xlu0 %v1266
          %v1268 = vpop.xlane.xlu0 %1267
          %v1269 = vmax.f32 %v1253, %v1259
          %v1270 = vmax.f32 %v1254, %v1262
          %v1271 = vmax.f32 %v1255, %v1265
          %v1272 = vmax.f32 %v1256, %v1268
          %v1273 = vsub.f32 %v1253, %v1269
          %v1274 = vsub.f32 %v1254, %v1270
          %v1275 = vsub.f32 %v1255, %v1271
          %v1276 = vsub.f32 %v1256, %v1272
          %v1277 = vmul.f32 %v1273, 1.442695
          %v1278 = vpow.pop %v1277
          %v1279 = vmul.f32 %v1274, 1.442695
          %v1280 = vpow.pop %v1279
          %v1281 = vmul.f32 %v1275, 1.442695
          %v1282 = vpow.pop %v1281
          %v1283 = vmul.f32 %v1276, 1.442695
          %v1284 = vpow.pop %v1283
          %1286 = vset.pattern.permute.xlu0 0
          %1287 = vperm.xlu0 %1286, %v1269
          %v1288 = vpop.permute.xlu0 %1287
          %1291 = vset.pattern.permute.xlu0 0
          %1292 = vperm.xlu0 %1291, %v1270
          %v1293 = vpop.permute.xlu0 %1292
          %1296 = vset.pattern.permute.xlu0 0
          %1297 = vperm.xlu0 %1296, %v1271
          %v1298 = vpop.permute.xlu0 %1297
          %1301 = vset.pattern.permute.xlu0 0
          %1302 = vperm.xlu0 %1301, %v1272
          %v1303 = vpop.permute.xlu0 %1302
          %v1305 = vsub.f32 %v1249, %v1288
          %v1306 = vsub.f32 %v1250, %v1293
          %v1307 = vsub.f32 %v1251, %v1298
          %v1308 = vsub.f32 %v1252, %v1303
          %v1309 = vmul.f32 %v1305, 1.442695
          %v1310 = vpow.pop %v1309
          %v1311 = vmul.f32 %v1306, 1.442695
          %v1312 = vpow.pop %v1311
          %v1313 = vmul.f32 %v1307, 1.442695
          %v1314 = vpow.pop %v1313
          %v1315 = vmul.f32 %v1308, 1.442695
          %v1316 = vpow.pop %v1315
          %v1317 = vld [vmem:[#allocation6] sm:$0xff]
          %v1318 = vld [vmem:[#allocation6 + $0x8] sm:$0xff]
          %v1319 = vld [vmem:[#allocation6 + $0x10] sm:$0xff]
          %v1320 = vld [vmem:[#allocation6 + $0x18] sm:$0xff]
          %v1321 = vmul.f32 %v1278, %v1317
          %v1322 = vmul.f32 %v1280, %v1318
          %v1323 = vmul.f32 %v1282, %v1319
          %v1324 = vmul.f32 %v1284, %v1320
          %v1325 = vsel %vm1051, %v1310, 0.0
          %1326 = vadd.xlane.f32.xlu0 %v1325
          %v1327 = vpop.xlane.xlu0 %1326
          %v1328 = vsel %vm1051, %v1312, 0.0
          %1329 = vadd.xlane.f32.xlu0 %v1328
          %v1330 = vpop.xlane.xlu0 %1329
          %v1331 = vsel %vm1051, %v1314, 0.0
          %1332 = vadd.xlane.f32.xlu0 %v1331
          %v1333 = vpop.xlane.xlu0 %1332
          %v1334 = vsel %vm1051, %v1316, 0.0
          %1335 = vadd.xlane.f32.xlu0 %v1334
          %v1336 = vpop.xlane.xlu0 %1335
          %v1337 = vadd.f32 %v1321, %v1327
          %v1338 = vadd.f32 %v1322, %v1330
          %v1339 = vadd.f32 %v1323, %v1333
          %v1340 = vadd.f32 %v1324, %v1336
          %vm1341 = vcmask 7168
          %1342 = vst.msk [vmem:[#allocation6] sm:$0xff] %vm1341, %v1337
          %1343 = vst.msk [vmem:[#allocation6 + $0x8] sm:$0xff] %vm1341, %v1338
          %1344 = vst.msk [vmem:[#allocation6 + $0x10] sm:$0xff] %vm1341, %v1339
          %1345 = vst.msk [vmem:[#allocation6 + $0x18] sm:$0xff] %vm1341, %v1340
          %v1346 = vld [vmem:[#allocation7] sm:$0xff]
          %v1347 = vld [vmem:[#allocation7 + $0x8] sm:$0xff]
          %v1348 = vld [vmem:[#allocation7 + $0x10] sm:$0xff]
          %v1349 = vld [vmem:[#allocation7 + $0x18] sm:$0xff]
          %1351 = vset.pattern.permute.xlu0 0
          %1352 = vperm.xlu0 %1351, %v1278
          %v1353 = vpop.permute.xlu0 %1352
          %1356 = vset.pattern.permute.xlu0 0
          %1357 = vperm.xlu0 %1356, %v1280
          %v1358 = vpop.permute.xlu0 %1357
          %1361 = vset.pattern.permute.xlu0 0
          %1362 = vperm.xlu0 %1361, %v1282
          %v1363 = vpop.permute.xlu0 %1362
          %1366 = vset.pattern.permute.xlu0 0
          %1367 = vperm.xlu0 %1366, %v1284
          %v1368 = vpop.permute.xlu0 %1367
          %v1370 = vmul.f32 %v1353, %v1346
          %v1371 = vmul.f32 %v1358, %v1347
          %v1372 = vmul.f32 %v1363, %v1348
          %v1373 = vmul.f32 %v1368, %v1349
          %v1374 = vpack.c.bf16 %v1310, %v1310
          %v1375 = vpack.c.bf16 %v1312, %v1312
          %v1376 = vpack.c.bf16 %v1314, %v1314
          %v1377 = vpack.c.bf16 %v1316, %v1316
          %v1379 = vsel %vm1051, %v1374, 0
          %vm1381 = vcmask 1043456
          %v1383 = vsel %vm1381, %v1043, 0
          %1385 = vmatprep.subr.bf16.mxu0 0
          %1386 = vmatpush1.bf16.msra.mxu0 %v1383
          %1387 = vmatprep.subr.bf16.mxu0 0
          %1388 = vmatpush1.bf16.msra.mxu0 0
          %1389 = vmatprep.subr.bf16.mxu0 0
          %1390 = vmatpush1.bf16.msra.mxu0 0
          %1391 = vmatprep.subr.bf16.mxu0 0
          %1392 = vmatpush1.bf16.msra.mxu0 0
          %1393 = vmatprep.subr.bf16.mxu0 0
          %1394 = vmatpush1.bf16.msra.mxu0 0
          %1395 = vmatprep.subr.bf16.mxu0 0
          %1396 = vmatpush1.bf16.msra.mxu0 0
          %1397 = vmatprep.subr.bf16.mxu0 0
          %1398 = vmatpush1.bf16.msra.mxu0 0
          %1399 = vmatprep.subr.bf16.mxu0 0
          %1400 = vmatpush1.bf16.msra.mxu0 0
          %1401 = vmatprep.subr.bf16.mxu0 0
          %1402 = vmatpush1.bf16.msra.mxu0 0
          %1403 = vmatprep.subr.bf16.mxu0 0
          %1404 = vmatpush1.bf16.msra.mxu0 0
          %1405 = vmatprep.subr.bf16.mxu0 0
          %1406 = vmatpush1.bf16.msra.mxu0 0
          %1407 = vmatprep.subr.bf16.mxu0 0
          %1408 = vmatpush1.bf16.msra.mxu0 0
          %1409 = vmatprep.subr.bf16.mxu0 0
          %1410 = vmatpush1.bf16.msra.mxu0 0
          %1411 = vmatprep.subr.bf16.mxu0 0
          %1412 = vmatpush1.bf16.msra.mxu0 0
          %1413 = vmatprep.subr.bf16.mxu0 0
          %1414 = vmatpush1.bf16.msra.mxu0 0
          %1415 = vmatprep.subr.bf16.mxu0 0
          %1416 = vmatpush1.bf16.msra.mxu0 0
          %1417 = vmatprep.mubr.bf16.mxu0 0
          %1418 = vmatmul.mubr.bf16.gmra.mrb[0].mxu0 %v1379
          %v1419 = vpop.f32.mrb[0].mxu0
          %v1420 = vadd.f32 0.0, %v1419
          %v1421 = vpop.f32.mrb[0].mxu0
          %v1422 = vpop.f32.mrb[0].mxu0
          %v1423 = vpop.f32.mrb[0].mxu0
          %1424 = vdwg.mxu0
          %v1426 = vsel %vm1051, %v1375, 0
          %v1429 = vsel %vm1381, %v1044, 0
          %1431 = vmatprep.subr.bf16.mxu0 0
          %1432 = vmatpush1.bf16.msra.mxu0 %v1429
          %1433 = vmatprep.subr.bf16.mxu0 0
          %1434 = vmatpush1.bf16.msra.mxu0 0
          %1435 = vmatprep.subr.bf16.mxu0 0
          %1436 = vmatpush1.bf16.msra.mxu0 0
          %1437 = vmatprep.subr.bf16.mxu0 0
          %1438 = vmatpush1.bf16.msra.mxu0 0
          %1439 = vmatprep.subr.bf16.mxu0 0
          %1440 = vmatpush1.bf16.msra.mxu0 0
          %1441 = vmatprep.subr.bf16.mxu0 0
          %1442 = vmatpush1.bf16.msra.mxu0 0
          %1443 = vmatprep.subr.bf16.mxu0 0
          %1444 = vmatpush1.bf16.msra.mxu0 0
          %1445 = vmatprep.subr.bf16.mxu0 0
          %1446 = vmatpush1.bf16.msra.mxu0 0
          %1447 = vmatprep.subr.bf16.mxu0 0
          %1448 = vmatpush1.bf16.msra.mxu0 0
          %1449 = vmatprep.subr.bf16.mxu0 0
          %1450 = vmatpush1.bf16.msra.mxu0 0
          %1451 = vmatprep.subr.bf16.mxu0 0
          %1452 = vmatpush1.bf16.msra.mxu0 0
          %1453 = vmatprep.subr.bf16.mxu0 0
          %1454 = vmatpush1.bf16.msra.mxu0 0
          %1455 = vmatprep.subr.bf16.mxu0 0
          %1456 = vmatpush1.bf16.msra.mxu0 0
          %1457 = vmatprep.subr.bf16.mxu0 0
          %1458 = vmatpush1.bf16.msra.mxu0 0
          %1459 = vmatprep.subr.bf16.mxu0 0
          %1460 = vmatpush1.bf16.msra.mxu0 0
          %1461 = vmatprep.subr.bf16.mxu0 0
          %1462 = vmatpush1.bf16.msra.mxu0 0
          %1463 = vmatprep.mubr.bf16.mxu0 0
          %1464 = vmatmul.mubr.bf16.gmra.mrb[0].mxu0 %v1426
          %v1465 = vpop.f32.mrb[0].mxu0
          %v1466 = vadd.f32 0.0, %v1465
          %v1467 = vpop.f32.mrb[0].mxu0
          %v1468 = vpop.f32.mrb[0].mxu0
          %v1469 = vpop.f32.mrb[0].mxu0
          %1470 = vdwg.mxu0
          %v1472 = vsel %vm1051, %v1376, 0
          %v1475 = vsel %vm1381, %v1045, 0
          %1477 = vmatprep.subr.bf16.mxu0 0
          %1478 = vmatpush1.bf16.msra.mxu0 %v1475
          %1479 = vmatprep.subr.bf16.mxu0 0
          %1480 = vmatpush1.bf16.msra.mxu0 0
          %1481 = vmatprep.subr.bf16.mxu0 0
          %1482 = vmatpush1.bf16.msra.mxu0 0
          %1483 = vmatprep.subr.bf16.mxu0 0
          %1484 = vmatpush1.bf16.msra.mxu0 0
          %1485 = vmatprep.subr.bf16.mxu0 0
          %1486 = vmatpush1.bf16.msra.mxu0 0
          %1487 = vmatprep.subr.bf16.mxu0 0
          %1488 = vmatpush1.bf16.msra.mxu0 0
          %1489 = vmatprep.subr.bf16.mxu0 0
          %1490 = vmatpush1.bf16.msra.mxu0 0
          %1491 = vmatprep.subr.bf16.mxu0 0
          %1492 = vmatpush1.bf16.msra.mxu0 0
          %1493 = vmatprep.subr.bf16.mxu0 0
          %1494 = vmatpush1.bf16.msra.mxu0 0
          %1495 = vmatprep.subr.bf16.mxu0 0
          %1496 = vmatpush1.bf16.msra.mxu0 0
          %1497 = vmatprep.subr.bf16.mxu0 0
          %1498 = vmatpush1.bf16.msra.mxu0 0
          %1499 = vmatprep.subr.bf16.mxu0 0
          %1500 = vmatpush1.bf16.msra.mxu0 0
          %1501 = vmatprep.subr.bf16.mxu0 0
          %1502 = vmatpush1.bf16.msra.mxu0 0
          %1503 = vmatprep.subr.bf16.mxu0 0
          %1504 = vmatpush1.bf16.msra.mxu0 0
          %1505 = vmatprep.subr.bf16.mxu0 0
          %1506 = vmatpush1.bf16.msra.mxu0 0
          %1507 = vmatprep.subr.bf16.mxu0 0
          %1508 = vmatpush1.bf16.msra.mxu0 0
          %1509 = vmatprep.mubr.bf16.mxu0 0
          %1510 = vmatmul.mubr.bf16.gmra.mrb[0].mxu0 %v1472
          %v1511 = vpop.f32.mrb[0].mxu0
          %v1512 = vadd.f32 0.0, %v1511
          %v1513 = vpop.f32.mrb[0].mxu0
          %v1514 = vpop.f32.mrb[0].mxu0
          %v1515 = vpop.f32.mrb[0].mxu0
          %1516 = vdwg.mxu0
          %v1518 = vsel %vm1051, %v1377, 0
          %v1521 = vsel %vm1381, %v1046, 0
          %1523 = vmatprep.subr.bf16.mxu0 0
          %1524 = vmatpush1.bf16.msra.mxu0 %v1521
          %1525 = vmatprep.subr.bf16.mxu0 0
          %1526 = vmatpush1.bf16.msra.mxu0 0
          %1527 = vmatprep.subr.bf16.mxu0 0
          %1528 = vmatpush1.bf16.msra.mxu0 0
          %1529 = vmatprep.subr.bf16.mxu0 0
          %1530 = vmatpush1.bf16.msra.mxu0 0
          %1531 = vmatprep.subr.bf16.mxu0 0
          %1532 = vmatpush1.bf16.msra.mxu0 0
          %1533 = vmatprep.subr.bf16.mxu0 0
          %1534 = vmatpush1.bf16.msra.mxu0 0
          %1535 = vmatprep.subr.bf16.mxu0 0
          %1536 = vmatpush1.bf16.msra.mxu0 0
          %1537 = vmatprep.subr.bf16.mxu0 0
          %1538 = vmatpush1.bf16.msra.mxu0 0
          %1539 = vmatprep.subr.bf16.mxu0 0
          %1540 = vmatpush1.bf16.msra.mxu0 0
          %1541 = vmatprep.subr.bf16.mxu0 0
          %1542 = vmatpush1.bf16.msra.mxu0 0
          %1543 = vmatprep.subr.bf16.mxu0 0
          %1544 = vmatpush1.bf16.msra.mxu0 0
          %1545 = vmatprep.subr.bf16.mxu0 0
          %1546 = vmatpush1.bf16.msra.mxu0 0
          %1547 = vmatprep.subr.bf16.mxu0 0
          %1548 = vmatpush1.bf16.msra.mxu0 0
          %1549 = vmatprep.subr.bf16.mxu0 0
          %1550 = vmatpush1.bf16.msra.mxu0 0
          %1551 = vmatprep.subr.bf16.mxu0 0
          %1552 = vmatpush1.bf16.msra.mxu0 0
          %1553 = vmatprep.subr.bf16.mxu0 0
          %1554 = vmatpush1.bf16.msra.mxu0 0
          %1555 = vmatprep.mubr.bf16.mxu0 0
          %1556 = vmatmul.mubr.bf16.gmra.mrb[0].mxu0 %v1518
          %v1557 = vpop.f32.mrb[0].mxu0
          %v1558 = vadd.f32 0.0, %v1557
          %v1559 = vpop.f32.mrb[0].mxu0
          %v1560 = vpop.f32.mrb[0].mxu0
          %v1561 = vpop.f32.mrb[0].mxu0
          %1562 = vdwg.mxu0
          %v1563 = vadd.f32 %v1370, %v1420
          %v1564 = vadd.f32 %v1371, %v1466
          %v1565 = vadd.f32 %v1372, %v1512
          %v1566 = vadd.f32 %v1373, %v1558
          %1567 = vst.msk [vmem:[#allocation7] sm:$0xff] %vm1051, %v1563
          %1568 = vst.msk [vmem:[#allocation7 + $0x8] sm:$0xff] %vm1051, %v1564
          %1569 = vst.msk [vmem:[#allocation7 + $0x10] sm:$0xff] %vm1051, %v1565
          %1570 = vst.msk [vmem:[#allocation7 + $0x18] sm:$0xff] %vm1051, %v1566
          %1571 = vst.msk [vmem:[#allocation5] sm:$0xff] %vm1341, %v1269
          %1572 = vst.msk [vmem:[#allocation5 + $0x8] sm:$0xff] %vm1341, %v1270
          %1573 = vst.msk [vmem:[#allocation5 + $0x10] sm:$0xff] %vm1341, %v1271
          %1574 = vst.msk [vmem:[#allocation5 + $0x18] sm:$0xff] %vm1341, %v1272
        $region88: #{tpu_custom_call.1} parent=47 // pred_fallthru
          _
        // Predicated region
        $region89: #{tpu_custom_call.1} parent=47 // pred_check
          %p1575 = pneg %p400
        $region90: #{tpu_custom_call.1} parent=47 // pred_check_branch
          %1577 = sbr.rel (%p1575) target = $region92
        $region91: #{tpu_custom_call.1} parent=47 // pred_region
          %v1578 = vld [vmem:[#allocation6] sm:$0xff]
          %v1579 = vld [vmem:[#allocation6 + $0x8] sm:$0xff]
          %v1580 = vld [vmem:[#allocation6 + $0x10] sm:$0xff]
          %v1581 = vld [vmem:[#allocation6 + $0x18] sm:$0xff]
          %v1582 = vrcp.pop %v1578
          %v1583 = vrcp.pop %v1579
          %v1584 = vrcp.pop %v1580
          %v1585 = vrcp.pop %v1581
          %v1586 = vld [vmem:[#allocation7] sm:$0xff]
          %v1587 = vld [vmem:[#allocation7 + $0x8] sm:$0xff]
          %v1588 = vld [vmem:[#allocation7 + $0x10] sm:$0xff]
          %v1589 = vld [vmem:[#allocation7 + $0x18] sm:$0xff]
          %1591 = vset.pattern.permute.xlu0 0
          %1592 = vperm.xlu0 %1591, %v1582
          %v1593 = vpop.permute.xlu0 %1592
          %1596 = vset.pattern.permute.xlu0 0
          %1597 = vperm.xlu0 %1596, %v1583
          %v1598 = vpop.permute.xlu0 %1597
          %1601 = vset.pattern.permute.xlu0 0
          %1602 = vperm.xlu0 %1601, %v1584
          %v1603 = vpop.permute.xlu0 %1602
          %1606 = vset.pattern.permute.xlu0 0
          %1607 = vperm.xlu0 %1606, %v1585
          %v1608 = vpop.permute.xlu0 %1607
          %v1610 = vmul.f32 %v1586, %v1593
          %v1611 = vmul.f32 %v1587, %v1598
          %v1612 = vmul.f32 %v1588, %v1603
          %v1613 = vmul.f32 %v1589, %v1608
          %v1614 = vcombine.low %v1610, %v1612
          %v1615 = vcombine.high %v1610, %v1612
          %v1617 = vunpack.c.l.s4 1983009808
          %v1618 = vunpack.c.0.s8 %v1617
          %v1619 = vlaneseq
          %v1620 = vshrl.u32 %v1619, 7
          %v1621 = vsub.s32 %v1618, %v1620
          %v1622 = vrot.slane %v1614, %v1621
          %v1624 = vunpack.c.l.s4 1983009808
          %v1625 = vunpack.c.0.s8 %v1624
          %v1626 = vlaneseq
          %v1627 = vshrl.u32 %v1626, 7
          %v1628 = vsub.s32 %v1625, %v1627
          %v1629 = vrot.slane %v1615, %v1628
          %v1630 = vcombine.low %v1611, %v1613
          %v1631 = vcombine.high %v1611, %v1613
          %v1633 = vunpack.c.l.s4 1983009808
          %v1634 = vunpack.c.0.s8 %v1633
          %v1635 = vlaneseq
          %v1636 = vshrl.u32 %v1635, 7
          %v1637 = vsub.s32 %v1634, %v1636
          %v1638 = vrot.slane %v1630, %v1637
          %v1640 = vunpack.c.l.s4 1983009808
          %v1641 = vunpack.c.0.s8 %v1640
          %v1642 = vlaneseq
          %v1643 = vshrl.u32 %v1642, 7
          %v1644 = vsub.s32 %v1641, %v1643
          %v1645 = vrot.slane %v1631, %v1644
          %v1646 = vcombine.low %v1622, %v1638
          %v1647 = vcombine.high %v1622, %v1638
          %v1649 = vunpack.c.l.s4 1934713408
          %v1650 = vunpack.c.0.s8 %v1649
          %v1651 = vlaneseq
          %v1652 = vshrl.u32 %v1651, 7
          %v1653 = vsub.s32 %v1650, %v1652
          %v1654 = vrot.slane %v1646, %v1653
          %v1656 = vunpack.c.l.s4 1934713408
          %v1657 = vunpack.c.0.s8 %v1656
          %v1658 = vlaneseq
          %v1659 = vshrl.u32 %v1658, 7
          %v1660 = vsub.s32 %v1657, %v1659
          %v1661 = vrot.slane %v1647, %v1660
          %v1662 = vcombine.low %v1629, %v1645
          %v1663 = vcombine.high %v1629, %v1645
          %v1665 = vunpack.c.l.s4 1934713408
          %v1666 = vunpack.c.0.s8 %v1665
          %v1667 = vlaneseq
          %v1668 = vshrl.u32 %v1667, 7
          %v1669 = vsub.s32 %v1666, %v1668
          %v1670 = vrot.slane %v1662, %v1669
          %v1672 = vunpack.c.l.s4 1934713408
          %v1673 = vunpack.c.0.s8 %v1672
          %v1674 = vlaneseq
          %v1675 = vshrl.u32 %v1674, 7
          %v1676 = vsub.s32 %v1673, %v1675
          %v1677 = vrot.slane %v1663, %v1676
          %v1678 = vcombine.high %v1654, 0.0
          %v1679 = vcombine.high %v1661, 0.0
          %v1680 = vcombine.high %v1670, 0.0
          %v1681 = vcombine.high %v1677, 0.0
          %v1682 = vcombine.low %v1654, %v1661
          %v1684 = vunpack.c.l.s4 1983009808
          %v1685 = vunpack.c.0.s8 %v1684
          %v1686 = vlaneseq
          %v1687 = vshrl.u32 %v1686, 7
          %v1688 = vsub.s32 %v1685, %v1687
          %v1689 = vrot.slane %v1682, %v1688
          %v1690 = vcombine.low %v1678, %v1679
          %v1692 = vunpack.c.l.s4 1983009808
          %v1693 = vunpack.c.0.s8 %v1692
          %v1694 = vlaneseq
          %v1695 = vshrl.u32 %v1694, 7
          %v1696 = vsub.s32 %v1693, %v1695
          %v1697 = vrot.slane %v1690, %v1696
          %v1698 = vcombine.low %v1670, %v1677
          %v1700 = vunpack.c.l.s4 1983009808
          %v1701 = vunpack.c.0.s8 %v1700
          %v1702 = vlaneseq
          %v1703 = vshrl.u32 %v1702, 7
          %v1704 = vsub.s32 %v1701, %v1703
          %v1705 = vrot.slane %v1698, %v1704
          %v1706 = vcombine.low %v1680, %v1681
          %v1708 = vunpack.c.l.s4 1983009808
          %v1709 = vunpack.c.0.s8 %v1708
          %v1710 = vlaneseq
          %v1711 = vshrl.u32 %v1710, 7
          %v1712 = vsub.s32 %v1709, %v1711
          %v1713 = vrot.slane %v1706, %v1712
          %v1714 = vcombine.low %v1689, %v1697
          %v1715 = vcombine.high %v1689, %v1697
          %v1717 = vunpack.c.l.s4 1934713408
          %v1718 = vunpack.c.0.s8 %v1717
          %v1719 = vlaneseq
          %v1720 = vshrl.u32 %v1719, 7
          %v1721 = vsub.s32 %v1718, %v1720
          %v1722 = vrot.slane %v1714, %v1721
          %v1724 = vunpack.c.l.s4 1934713408
          %v1725 = vunpack.c.0.s8 %v1724
          %v1726 = vlaneseq
          %v1727 = vshrl.u32 %v1726, 7
          %v1728 = vsub.s32 %v1725, %v1727
          %v1729 = vrot.slane %v1715, %v1728
          %v1730 = vcombine.low %v1705, %v1713
          %v1731 = vcombine.high %v1705, %v1713
          %v1733 = vunpack.c.l.s4 1934713408
          %v1734 = vunpack.c.0.s8 %v1733
          %v1735 = vlaneseq
          %v1736 = vshrl.u32 %v1735, 7
          %v1737 = vsub.s32 %v1734, %v1736
          %v1738 = vrot.slane %v1730, %v1737
          %v1740 = vunpack.c.l.s4 1934713408
          %v1741 = vunpack.c.0.s8 %v1740
          %v1742 = vlaneseq
          %v1743 = vshrl.u32 %v1742, 7
          %v1744 = vsub.s32 %v1741, %v1743
          %v1745 = vrot.slane %v1731, %v1744
          %v1746 = vcombine.low %v1722, %v1738
          %v1747 = vcombine.high %v1722, %v1738
          %v1748 = vcombine.low %v1729, %v1745
          %v1749 = vcombine.high %v1729, %v1745
          %1751 = vrot.lane.b32.xlu0 %v1747, 8
          %v1752 = vpop.permute.xlu0 %1751
          %1755 = vrot.lane.b32.xlu0 %v1748, 16
          %v1756 = vpop.permute.xlu0 %1755
          %1759 = vrot.lane.b32.xlu0 %v1749, 24
          %v1760 = vpop.permute.xlu0 %1759
          %vm1762 = vcmask 64512
          %v1763 = vsel %vm1762, %v1746, %v1752
          %vm1764 = vcmask 130048
          %v1765 = vsel %vm1764, %v1763, %v1756
          %vm1766 = vcmask 195584
          %v1767 = vsel %vm1766, %v1765, %v1760
          %v1768 = vpack.c.bf16 %v1767, %v1767
          %v1769 = vld [vmem:[#allocation17] sm:$0xf]
          %v1770 = vld [vmem:[#allocation17 + $0x4] sm:$0xf]
          %v1771 = vld [vmem:[#allocation17 + $0x8] sm:$0xf]
          %v1772 = vld [vmem:[#allocation17 + $0xc] sm:$0xf]
          %v1773 = vld [vmem:[#allocation19] sm:$0x1]
          %v1775 = vlaneseq
          %v1776 = vshrl.u32 %v1775, 7
          %v1777 = vsub.s32 0, %v1776
          %v1778 = vrot.slane %v1773, %v1777
          %v1784 = vunpack.c.l.b16 %v1769
          %v1785 = vunpack.c.l.b16 %v1770
          %v1786 = vunpack.c.l.b16 %v1771
          %v1787 = vunpack.c.l.b16 %v1772
          %v1788 = vpack.c.b16 %v1785, %v1784
          %v1789 = vpack.c.b16 %v1787, %v1786
          %vm1792 = vcmask 261120
          %v1794 = vsel %vm1792, %v1768, 0
          %1796 = vmatprep.subr.bf16.mxu0 0
          %1797 = vmatpush1.bf16.msra.mxu0 %v1788
          %1798 = vmatprep.subr.bf16.mxu0 0
          %1799 = vmatpush1.bf16.msra.mxu0 %v1789
          %1800 = vmatprep.subr.bf16.mxu0 0
          %1801 = vmatpush1.bf16.msra.mxu0 0
          %1802 = vmatprep.subr.bf16.mxu0 0
          %1803 = vmatpush1.bf16.msra.mxu0 0
          %1804 = vmatprep.subr.bf16.mxu0 0
          %1805 = vmatpush1.bf16.msra.mxu0 0
          %1806 = vmatprep.subr.bf16.mxu0 0
          %1807 = vmatpush1.bf16.msra.mxu0 0
          %1808 = vmatprep.subr.bf16.mxu0 0
          %1809 = vmatpush1.bf16.msra.mxu0 0
          %1810 = vmatprep.subr.bf16.mxu0 0
          %1811 = vmatpush1.bf16.msra.mxu0 0
          %1812 = vmatprep.subr.bf16.mxu0 0
          %1813 = vmatpush1.bf16.msra.mxu0 0
          %1814 = vmatprep.subr.bf16.mxu0 0
          %1815 = vmatpush1.bf16.msra.mxu0 0
          %1816 = vmatprep.subr.bf16.mxu0 0
          %1817 = vmatpush1.bf16.msra.mxu0 0
          %1818 = vmatprep.subr.bf16.mxu0 0
          %1819 = vmatpush1.bf16.msra.mxu0 0
          %1820 = vmatprep.subr.bf16.mxu0 0
          %1821 = vmatpush1.bf16.msra.mxu0 0
          %1822 = vmatprep.subr.bf16.mxu0 0
          %1823 = vmatpush1.bf16.msra.mxu0 0
          %1824 = vmatprep.subr.bf16.mxu0 0
          %1825 = vmatpush1.bf16.msra.mxu0 0
          %1826 = vmatprep.subr.bf16.mxu0 0
          %1827 = vmatpush1.bf16.msra.mxu0 0
          %1828 = vmatprep.mubr.bf16.mxu0 0
          %1829 = vmatmul.mubr.bf16.gmra.mrb[0].mxu0 %v1794
          %v1830 = vpop.f32.mrb[0].mxu0
          %v1831 = vadd.f32 %v1778, %v1830
          %v1832 = vpop.f32.mrb[0].mxu0
          %v1833 = vpop.f32.mrb[0].mxu0
          %v1834 = vpop.f32.mrb[0].mxu0
          %1835 = vdwg.mxu0
          %1836 = vst.msk [vmem:[%s398] sm:$0xff] %vm1792, %v1831
        $region92: #{tpu_custom_call.1} parent=47 // pred_fallthru
          _
        %s1837 = sand.u32 %s210, 1
        %s1838 = scalar_lea.sflag [#allocation10], %s1837
        %s1839 = sand.u32 %s210, 1
        %s1840 = smul.addr %s1839, 8
        %s1841 = scalar_lea.vmem [#allocation20], %s1840
        // Predicated region
        $region93: #{tpu_custom_call.1} parent=47 // pred_check
          %p1842 = pneg %p220
        $region94: #{tpu_custom_call.1} parent=47 // pred_check_branch
          %1844 = sbr.rel (%p1842) target = $region96
        $region95: #{tpu_custom_call.1} parent=47 // pred_region
          %s1846 = ssub.s32 128, 128
          %1847 = vsyncadd %s1838, %s1846
          %s1848 = sadd.s32 %s33, %s32
          %s1849 = smul.addr %s1848, 128
          %s1850 = scalar_lea.hbm %s7, %s1849
          %s1852 = sshll.u32 %s1841, 4
          %s1853 = int_to_ptr.vmem [resolvable:$true] %s1852
          %1855 = dma.vmem_to_hbm [thread:$0]  %s1853, 128, %s1850, %s1838
        $region96: #{tpu_custom_call.1} parent=47 // pred_fallthru
          _
      $region48: #{tpu_custom_call.1} parent=5 // pred_fallthru
        _
      %p1856 = scmp.le.s32.totalorder 2, %s22
      // Predicated region
      $region97: #{tpu_custom_call.1} parent=5 // pred_check
        %p1857 = pneg %p1856
      $region98: #{tpu_custom_call.1} parent=5 // pred_check_branch
        %1859 = sbr.rel (%p1857) target = $region100
      $region99: #{tpu_custom_call.1} parent=5 // pred_region
        %s1860 = ssub.s32 %s22, 2
        // Predicated region
        $region101: #{tpu_custom_call.1} parent=99 // pred_check
          %p1861 = pneg %p226
        $region102: #{tpu_custom_call.1} parent=99 // pred_check_branch
          %1863 = sbr.rel (%p1861) target = $region104
        $region103: #{tpu_custom_call.1} parent=99 // pred_region
          %s1864 = sand.u32 %s211, 1
          %s1865 = scalar_lea.sflag [#allocation10], %s1864
          %s1866 = sand.u32 %s211, 1
          %s1867 = smul.addr %s1866, 8
          %s1868 = scalar_lea.vmem [#allocation20], %s1867
          %1869 = dma.done %s1865, 128
        $region104: #{tpu_custom_call.1} parent=99 // pred_fallthru
          _
      $region100: #{tpu_custom_call.1} parent=5 // pred_fallthru
        _
    $region6: #{tpu_custom_call.1} parent=1 // loop_footer
      %s26 = sadd.s32 1, %s22
    $region7: #{tpu_custom_call.1} parent=1 // loop_footer_branch
      %21 = sbr.rel target = $region3
    $region8: #{tpu_custom_call.1} parent=1 // loop_exit
      _
    %1870 = vsyncpa [#allocation9], 1
    %s1871 = scalar_lea.sflag [#allocation9], 1
    %1872 = vsyncpa %s1871, 1
    %1873 = vsyncpa [#allocation12], 1
    %1874 = vsyncpa [#allocation15], 1
    %1875 = vsyncpa [#allocation18], 1
    %1876 = vsyncpa [#allocation10], 1
    %s1877 = scalar_lea.sflag [#allocation10], 1
    %1878 = vsyncpa %s1877, 1

</llo_original>
